<compile_context>
chip_gen: v7x
topology: tpu7x:2x2x1
jax: 0.10.0
libtpu: 0.0.40
codegen_flags: <defaults>
</compile_context>

<pallas_src>
import math
import functools

import jax
import jax.numpy as jnp
from jax.experimental import pallas as pl
from jax.experimental.pallas import tpu as pltpu


def _pick_tile(dim, pref, align):
    """Largest tile <= pref that divides dim and is a multiple of align.
    Falls back to the full dimension (block == array dim is always legal)."""
    if dim <= pref:
        return dim
    t = (pref // align) * align
    while t >= align:
        if dim % t == 0:
            return t
        t -= align
    return dim


# ---------------------------------------------------------------------------
# A/D) Tiled, fused linear:  y[p] = x @ w[p]   with w stored (P, K_in, N_out)
# ---------------------------------------------------------------------------
def _stacked_linear_kernel(x_ref, w_ref, o_ref, acc_ref):
    k = pl.program_id(3)

    @pl.when(k == 0)
    def _():
        acc_ref[...] = jnp.zeros_like(acc_ref)

    # Canonical MXU orientation: (tm, tk) @ (tk, tn) — weights were transposed
    # once at init, so no in-kernel relayout competes with the matmul push.
    acc_ref[...] += jnp.dot(x_ref[...], w_ref[0],
                            preferred_element_type=jnp.float32)

    @pl.when(k == pl.num_programs(3) - 1)
    def _():
        o_ref[0] = acc_ref[...].astype(o_ref.dtype)


def stacked_linear(x2d, w_stack, *, tm=512, tn=512, tk=512,
                   vmem_limit_bytes=None):
    """x2d: (M, K); w_stack: (P, K, N) -> (P, M, N).  P=3 fuses Q/K/V."""
    M, K = x2d.shape
    P, K2, N = w_stack.shape
    assert K == K2
    tm = _pick_tile(M, tm, 8)
    tn = _pick_tile(N, tn, 128)
    tk = _pick_tile(K, tk, 128)
    grid = (P, M // tm, N // tn, K // tk)
    cp = dict(dimension_semantics=("parallel", "parallel", "parallel", "arbitrary"))
    if vmem_limit_bytes is not None:   # raise on v5e/v6e for even bigger tiles
        cp["vmem_limit_bytes"] = vmem_limit_bytes
    return pl.pallas_call(
        _stacked_linear_kernel,
        grid=grid,
        out_shape=jax.ShapeDtypeStruct((P, M, N), x2d.dtype),
        in_specs=[
            pl.BlockSpec((tm, tk), lambda p, m, n, k: (m, k)),
            pl.BlockSpec((1, tk, tn), lambda p, m, n, k: (p, k, n)),
        ],
        out_specs=pl.BlockSpec((1, tm, tn), lambda p, m, n, k: (p, m, n)),
        scratch_shapes=[pltpu.VMEM((tm, tn), jnp.float32)],
        compiler_params=pltpu.CompilerParams(**cp),
    )(x2d, w_stack)


# ---------------------------------------------------------------------------
# B) Linformer compression:  K' = E[:qlen]^T K,  V' = F[:qlen]^T V
#    EF^T stored (2, k_lin, max_pos); per batch, all heads at once.
# ---------------------------------------------------------------------------
def _compress_kernel(kv_ref, ef_ref, o_ref, acc_ref):
    s = pl.program_id(2)

    @pl.when(s == 0)
    def _():
        acc_ref[...] = jnp.zeros_like(acc_ref)

    # Canonical orientation: (k_lin, ts) @ (ts, hidden) — no in-kernel
    # transpose of the EF tile.
    acc_ref[...] += jax.lax.dot_general(
        ef_ref[0], kv_ref[0, 0],
        (((1,), (0,)), ((), ())),
        preferred_element_type=jnp.float32)

    @pl.when(s == pl.num_programs(2) - 1)
    def _():
        # Cast back to the activation dtype so the attention matmuls run at
        # full MXU rate (and match the torch reference's dtype behavior).
        o_ref[0, 0] = acc_ref[...].astype(o_ref.dtype)


def linformer_compress(qkv, ef_t, *, ts_pref=512):
    """qkv: (3, bsz, qlen, hidden); ef_t: (2, k_lin, max_pos)
    -> (2, bsz, k_lin, hidden)."""
    _, bsz, qlen, hidden = qkv.shape
    k_lin, max_pos = ef_t.shape[1], ef_t.shape[2]

    # Seq tile lands on EF^T's lane axis -> prefer a multiple of 128 dividing
    # qlen so the pre-stacked EF^T is passed whole (reads restricted to the
    # first qlen columns by grid + index_map; no per-forward copy).
    ts = 0
    t = (min(ts_pref, qlen) // 128) * 128
    while t >= 128:
        if qlen % t == 0:
            ts = t
            break
        t -= 128
    if ts == 0:
        # No aligned divisor: slice EF^T down to qlen columns (tiny copy) so a
        # single full-extent seq block is a legal BlockSpec.
        if qlen != max_pos:
            ef_t = ef_t[:, :, :qlen]
        ts = qlen

    grid = (2, bsz, qlen // ts)
    return pl.pallas_call(
        _compress_kernel,
        grid=grid,
        out_shape=jax.ShapeDtypeStruct((2, bsz, k_lin, hidden), qkv.dtype),
        in_specs=[
            # planes 1 (K) and 2 (V) of the fused QKV tensor
            pl.BlockSpec((1, 1, ts, hidden), lambda p, b, s: (p + 1, b, s, 0)),
            pl.BlockSpec((1, k_lin, ts), lambda p, b, s: (p, 0, s)),
        ],
        out_specs=pl.BlockSpec((1, 1, k_lin, hidden),
                               lambda p, b, s: (p, b, 0, 0)),
        scratch_shapes=[pltpu.VMEM((k_lin, hidden), jnp.float32)],
        compiler_params=pltpu.CompilerParams(
            dimension_semantics=("parallel", "parallel", "arbitrary")),
    )(qkv, ef_t)


# ---------------------------------------------------------------------------
# C) Attention core: softmax(Q K'^T) V'   (scale pre-folded into Wq;
#    all heads of a (batch, q-tile) per grid step; one lane-dense store)
# ---------------------------------------------------------------------------
def _linformer_attn_kernel(q_ref, k_ref, v_ref, o_ref, *, num_heads):
    q = q_ref[0, 0]              # (tq, hidden); 1/sqrt(d) already in Wq
    k = k_ref[0, 0]              # (klen, hidden); klen = k_lin or qlen
    v = v_ref[0, 0]
    head_dim = q.shape[-1] // num_heads
    outs = []
    for h in range(num_heads):
        sl = slice(h * head_dim, (h + 1) * head_dim)
        q_h, k_h, v_h = q[:, sl], k[:, sl], v[:, sl]
        s = jax.lax.dot_general(q_h, k_h, (((1,), (1,)), ((), ())),
                                preferred_element_type=jnp.float32)
        m = jnp.max(s, axis=-1, keepdims=True)           # softmax in f32 (torch)
        p = jnp.exp(s - m)
        denom = jnp.sum(p, axis=-1, keepdims=True)
        probs = p * pl.reciprocal(denom, approx=True)     # EUP, off the VALU path
        # TODO(synk): attention_mask add (pre-softmax) and attention dropout are
        # not wired in (forward exercised with mask=None, eval mode).
        outs.append(jnp.dot(probs.astype(v_h.dtype), v_h,
                            preferred_element_type=jnp.float32))
    # Single unmasked lane-dense (tq, hidden) store instead of per-head
    # sub-128-lane masked stores.
    o_ref[0] = jnp.concatenate(outs, axis=-1).astype(o_ref.dtype)


def linformer_attention_core(qkv, kv_src, k_plane, v_plane, *,
                             num_heads, tq=512):
    _, bsz, qlen, hidden = qkv.shape
    klen = kv_src.shape[2]
    tq = _pick_tile(qlen, tq, 8)
    grid = (bsz, qlen // tq)
    kernel = functools.partial(_linformer_attn_kernel, num_heads=num_heads)
    return pl.pallas_call(
        kernel,
        grid=grid,
        out_shape=jax.ShapeDtypeStruct((bsz, qlen, hidden), qkv.dtype),
        in_specs=[
            pl.BlockSpec((1, 1, tq, hidden), lambda b, qi: (0, b, qi, 0)),
            # K'/V' block index is constant across q-tiles -> not re-DMA'd.
            pl.BlockSpec((1, 1, klen, hidden),
                         lambda b, qi: (k_plane, b, 0, 0)),
            pl.BlockSpec((1, 1, klen, hidden),
                         lambda b, qi: (v_plane, b, 0, 0)),
        ],
        out_specs=pl.BlockSpec((1, tq, hidden), lambda b, qi: (b, qi, 0)),
        compiler_params=pltpu.CompilerParams(
            dimension_semantics=("parallel", "parallel")),
    )(qkv, kv_src, kv_src)


# ---------------------------------------------------------------------------
# Full forward (mask=None, no KV-cache, eval mode)
# ---------------------------------------------------------------------------
def prepare_linformer_params(params, *, num_heads):
    """One-time (init-time) packing:
       * QKV weights transposed to (in, out) and stacked -> (3, K, N); the
         softmax scale 1/sqrt(head_dim) is folded into Wq here.
       * output weight transposed -> (1, K, N).
       * E/F stacked and transposed -> EF^T (2, k_lin, max_pos)."""
    hidden = params["wq"].shape[1]
    head_dim = hidden // num_heads
    scale = 1.0 / math.sqrt(head_dim)
    w_qkv = jnp.stack([(params["wq"] * scale).T,
                       params["wk"].T,
                       params["wv"].T], axis=0)          # (3, K_in, N_out)
    return {
        "w_qkv": w_qkv,
        "w_o": params["wo"].T[None],                     # (1, K_in, N_out)
        "EF_T": jnp.stack([params["E"].T, params["F"].T], axis=0),
    }


def linformer_attention(hidden_states, prepared, *, num_heads, k_lin):
    bsz, qlen, hidden = hidden_states.shape
    x2d = hidden_states.reshape(bsz * qlen, hidden)

    # Fused Q/K/V projection: activations are read from HBM once for all three.
    qkv = stacked_linear(x2d, prepared["w_qkv"])       # (3, M, hidden)
    qkv = qkv.reshape(3, bsz, qlen, hidden)            # free (contiguous) reshape

    if qlen > k_lin:
        # Linformer compression path; EF^T pre-stacked/pre-transposed at init.
        kv_comp = linformer_compress(qkv, prepared["EF_T"])   # (2, bsz, k, hidden)
        attn = linformer_attention_core(qkv, kv_comp, 0, 1, num_heads=num_heads)
    else:
        # No compression: K/V come straight from the fused QKV tensor; E/F are
        # never passed into (or DMA'd by) the kernel.
        attn = linformer_attention_core(qkv, qkv, 1, 2, num_heads=num_heads)

    # Head merge already has the (bsz, qlen, hidden) memory layout, so the
    # output projection consumes it directly (no transpose).
    out = stacked_linear(attn.reshape(bsz * qlen, hidden), prepared["w_o"])
    return out.reshape(bsz, qlen, hidden)


# ---------------------------------------------------------------------------
# Pure-JAX reference (mirrors the PyTorch forward) for a correctness check.
# ---------------------------------------------------------------------------
def _reference(x, params, num_heads, k_lin):
    bsz, qlen, hidden = x.shape
    d = hidden // num_heads
    q = x @ params["wq"].T
    k = x @ params["wk"].T
    v = x @ params["wv"].T

    def heads(t):
        return jnp.transpose(t.reshape(bsz, qlen, num_heads, d), (0, 2, 1, 3))

    q, k, v = heads(q), heads(k), heads(v)
    if qlen > k_lin:
        E = params["E"][:qlen][None, None]
        F = params["F"][:qlen][None, None]
        k = jnp.matmul(jnp.swapaxes(E, -2, -1), k)
        v = jnp.matmul(jnp.swapaxes(F, -2, -1), v)
    w = jnp.matmul(q, jnp.swapaxes(k, -2, -1)) / math.sqrt(d)
    w = jax.nn.softmax(w.astype(jnp.float32), axis=-1).astype(q.dtype)
    o = jnp.matmul(w, v)
    o = jnp.transpose(o, (0, 2, 1, 3)).reshape(bsz, qlen, hidden)
    return o @ params["wo"].T


if __name__ == "__main__":
    key = jax.random.PRNGKey(0)
    hidden, num_heads = 32, 4
    k_lin = 8            # Linformer projection dim
    max_pos = 64         # config.max_position_embeddings

    ks = jax.random.split(key, 7)
    params = {
        "wq": 0.02 * jax.random.normal(ks[0], (hidden, hidden), jnp.float32),
        "wk": 0.02 * jax.random.normal(ks[1], (hidden, hidden), jnp.float32),
        "wv": 0.02 * jax.random.normal(ks[2], (hidden, hidden), jnp.float32),
        "wo": 0.02 * jax.random.normal(ks[3], (hidden, hidden), jnp.float32),
        "E": jax.random.normal(ks[4], (max_pos, k_lin), jnp.float32),
        "F": jax.random.normal(ks[5], (max_pos, k_lin), jnp.float32),
    }
    prepared = prepare_linformer_params(params, num_heads=num_heads)
    fwd = jax.jit(functools.partial(linformer_attention,
                                    num_heads=num_heads, k_lin=k_lin))

    # Case 1: qlen > k -> Linformer compression path.
    x1 = jax.random.normal(ks[6], (2, 16, hidden), jnp.float32)
    out1 = jax.block_until_ready(fwd(x1, prepared))
    assert out1.shape == x1.shape
    ref1 = _reference(x1, params, num_heads, k_lin)
    # Tolerance accounts for the approximate (EUP) reciprocal in the softmax.
    assert jnp.allclose(out1, ref1, atol=1e-2, rtol=1e-2)

    # Case 2: qlen <= k -> plain attention path (E/F untouched).
    x2 = x1[:, :8, :]
    out2 = jax.block_until_ready(fwd(x2, prepared))
    assert out2.shape == x2.shape
    ref2 = _reference(x2, params, num_heads, k_lin)
    assert jnp.allclose(out2, ref2, atol=1e-2, rtol=1e-2)

    print("KERNEL_OK")
</pallas_src>

<mosaic_0001>
module attributes {stable_mosaic.version = 11 : i64} {
  func.func @_stacked_linear_kernel(%arg0: i32, %arg1: i32, %arg2: i32, %arg3: i32, %arg4: memref<32x32xf32, #tpu.memory_space<vmem>>, %arg5: memref<1x32x32xf32, #tpu.memory_space<vmem>>, %arg6: memref<1x32x32xf32, #tpu.memory_space<vmem>>, %arg7: memref<32x32xf32, #tpu.memory_space<vmem>>) attributes {dimension_semantics = [#tpu.dimension_semantics<parallel>, #tpu.dimension_semantics<parallel>, #tpu.dimension_semantics<parallel>, #tpu.dimension_semantics<arbitrary>], iteration_bounds = array<i64: 3, 1, 1, 1>, scalar_prefetch = 0 : i64, scratch_operands = 1 : i64, tpu.core_type = #tpu.core_type<tc>, window_params = [{transform_indices = @transform_0, window_bounds = array<i64: 32, 32>}, {transform_indices = @transform_1, window_bounds = array<i64: 1, 32, 32>}, {transform_indices = @transform_2, window_bounds = array<i64: 1, 32, 32>}]} {
    %c0_i32 = arith.constant 0 : i32
    %0 = arith.cmpi eq, %arg3, %c0_i32 : i32
    %1 = arith.extui %0 : i1 to i32
    %c0_i32_0 = arith.constant 0 : i32
    %2 = arith.cmpi ne, %1, %c0_i32_0 : i32
    scf.if %2 {
      %cst_11 = arith.constant 0.000000e+00 : f32
      %13 = vector.broadcast %cst_11 : f32 to vector<32x32xf32>
      %c0_12 = arith.constant 0 : index
      %c0_13 = arith.constant 0 : index
      %14 = vector.load %arg7[%c0_12, %c0_13] : memref<32x32xf32, #tpu.memory_space<vmem>>, vector<32x32xf32>
      tpu.vector_store %arg7[%c0_12, %c0_13], %13 {strides = array<i32>} : memref<32x32xf32, #tpu.memory_space<vmem>>, vector<32x32xf32>,
    } else {
    }
    %c0 = arith.constant 0 : index
    %c0_1 = arith.constant 0 : index
    %3 = vector.load %arg7[%c0, %c0_1] : memref<32x32xf32, #tpu.memory_space<vmem>>, vector<32x32xf32>
    %c0_2 = arith.constant 0 : index
    %c0_3 = arith.constant 0 : index
    %4 = vector.load %arg4[%c0_2, %c0_3] : memref<32x32xf32, #tpu.memory_space<vmem>>, vector<32x32xf32>
    %c0_4 = arith.constant 0 : index
    %c0_5 = arith.constant 0 : index
    %c0_6 = arith.constant 0 : index
    %5 = vector.load %arg5[%c0_4, %c0_5, %c0_6] : memref<1x32x32xf32, #tpu.memory_space<vmem>>, vector<1x32x32xf32>
    %6 = vector.shape_cast %5 : vector<1x32x32xf32> to vector<32x32xf32>
    %cst = arith.constant dense<0.000000e+00> : vector<32x32xf32>
    %7 = tpu.matmul %4, %6, %cst {dimension_numbers = #tpu.dot_dimension_numbers<[1], [0], [0], [1], [0, 0, 1, 1], [], []>} : vector<32x32xf32>, vector<32x32xf32>, vector<32x32xf32> -> vector<32x32xf32>
    %8 = arith.addf %3, %7 : vector<32x32xf32>
    %c0_7 = arith.constant 0 : index
    %c0_8 = arith.constant 0 : index
    %9 = vector.load %arg7[%c0_7, %c0_8] : memref<32x32xf32, #tpu.memory_space<vmem>>, vector<32x32xf32>
    tpu.vector_store %arg7[%c0_7, %c0_8], %8 {strides = array<i32>} : memref<32x32xf32, #tpu.memory_space<vmem>>, vector<32x32xf32>,
    %c0_i32_9 = arith.constant 0 : i32
    %10 = arith.cmpi eq, %arg3, %c0_i32_9 : i32
    %11 = arith.extui %10 : i1 to i32
    %c0_i32_10 = arith.constant 0 : i32
    %12 = arith.cmpi ne, %11, %c0_i32_10 : i32
    scf.if %12 {
      %c0_11 = arith.constant 0 : index
      %c0_12 = arith.constant 0 : index
      %13 = vector.load %arg7[%c0_11, %c0_12] : memref<32x32xf32, #tpu.memory_space<vmem>>, vector<32x32xf32>
      %c0_13 = arith.constant 0 : index
      %c0_14 = arith.constant 0 : index
      %c0_15 = arith.constant 0 : index
      %14 = vector.load %arg6[%c0_13, %c0_14, %c0_15] : memref<1x32x32xf32, #tpu.memory_space<vmem>>, vector<1x32x32xf32>
      %15 = vector.shape_cast %14 : vector<1x32x32xf32> to vector<32x32xf32>
      %16 = vector.shape_cast %13 : vector<32x32xf32> to vector<1x32x32xf32>
      tpu.vector_store %arg6[%c0_13, %c0_14, %c0_15], %16 {strides = array<i32>} : memref<1x32x32xf32, #tpu.memory_space<vmem>>, vector<1x32x32xf32>,
    } else {
    }
    return
  }
  func.func @transform_0(%arg0: i32, %arg1: i32, %arg2: i32, %arg3: i32) -> (i32, i32) {
    %c0_i32 = arith.constant 0 : i32
    return %arg1, %arg3 : i32, i32
  }
  func.func @transform_1(%arg0: i32, %arg1: i32, %arg2: i32, %arg3: i32) -> (i32, i32, i32) {
    %c0_i32 = arith.constant 0 : i32
    return %arg0, %arg3, %arg2 : i32, i32, i32
  }
  func.func @transform_2(%arg0: i32, %arg1: i32, %arg2: i32, %arg3: i32) -> (i32, i32, i32) {
    %c0_i32 = arith.constant 0 : i32
    return %arg0, %arg1, %arg2 : i32, i32, i32
  }
}

module attributes {stable_mosaic.version = 11 : i64} {
  func.func @_linformer_attn_kernel(%arg0: i32, %arg1: i32, %arg2: memref<1x1x16x32xf32, #tpu.memory_space<vmem>>, %arg3: memref<1x1x8x32xf32, #tpu.memory_space<vmem>>, %arg4: memref<1x1x8x32xf32, #tpu.memory_space<vmem>>, %arg5: memref<1x16x32xf32, #tpu.memory_space<vmem>>) attributes {dimension_semantics = [#tpu.dimension_semantics<parallel>, #tpu.dimension_semantics<parallel>], iteration_bounds = array<i64: 2, 1>, scalar_prefetch = 0 : i64, scratch_operands = 0 : i64, tpu.core_type = #tpu.core_type<tc>, window_params = [{transform_indices = @transform_0, window_bounds = array<i64: 1, 1, 16, 32>}, {transform_indices = @transform_1, window_bounds = array<i64: 1, 1, 8, 32>}, {transform_indices = @transform_2, window_bounds = array<i64: 1, 1, 8, 32>}, {transform_indices = @transform_3, window_bounds = array<i64: 1, 16, 32>}]} {
    %c0 = arith.constant 0 : index
    %c0_0 = arith.constant 0 : index
    %c0_1 = arith.constant 0 : index
    %c0_2 = arith.constant 0 : index
    %0 = vector.load %arg2[%c0, %c0_0, %c0_1, %c0_2] : memref<1x1x16x32xf32, #tpu.memory_space<vmem>>, vector<1x1x16x32xf32>
    %1 = vector.shape_cast %0 : vector<1x1x16x32xf32> to vector<16x32xf32>
    %c0_3 = arith.constant 0 : index
    %c0_4 = arith.constant 0 : index
    %c0_5 = arith.constant 0 : index
    %c0_6 = arith.constant 0 : index
    %2 = vector.load %arg3[%c0_3, %c0_4, %c0_5, %c0_6] : memref<1x1x8x32xf32, #tpu.memory_space<vmem>>, vector<1x1x8x32xf32>
    %3 = vector.shape_cast %2 : vector<1x1x8x32xf32> to vector<8x32xf32>
    %c0_7 = arith.constant 0 : index
    %c0_8 = arith.constant 0 : index
    %c0_9 = arith.constant 0 : index
    %c0_10 = arith.constant 0 : index
    %4 = vector.load %arg4[%c0_7, %c0_8, %c0_9, %c0_10] : memref<1x1x8x32xf32, #tpu.memory_space<vmem>>, vector<1x1x8x32xf32>
    %5 = vector.shape_cast %4 : vector<1x1x8x32xf32> to vector<8x32xf32>
    %6 = vector.extract_strided_slice %1 {offsets = [0, 0], sizes = [16, 8], strides = [1, 1]} : vector<16x32xf32> to vector<16x8xf32>
    %7 = vector.extract_strided_slice %3 {offsets = [0, 0], sizes = [8, 8], strides = [1, 1]} : vector<8x32xf32> to vector<8x8xf32>
    %8 = vector.extract_strided_slice %5 {offsets = [0, 0], sizes = [8, 8], strides = [1, 1]} : vector<8x32xf32> to vector<8x8xf32>
    %cst = arith.constant dense<0.000000e+00> : vector<16x8xf32>
    %9 = tpu.matmul %6, %7, %cst {dimension_numbers = #tpu.dot_dimension_numbers<[1], [1], [0], [0], [0, 0, 1, 0], [], []>} : vector<16x8xf32>, vector<8x8xf32>, vector<16x8xf32> -> vector<16x8xf32>
    %cst_11 = arith.constant dense<0xFF800000> : vector<16xf32>
    %10 = vector.multi_reduction <maximumf>, %9, %cst_11 [1] : vector<16x8xf32> to vector<16xf32>
    %11 = vector.shape_cast %10 : vector<16xf32> to vector<16x1xf32>
    %12 = vector.broadcast %11 : vector<16x1xf32> to vector<16x8xf32>
    %13 = arith.subf %9, %12 : vector<16x8xf32>
    %14 = math.exp %13 : vector<16x8xf32>
    %cst_12 = arith.constant dense<0.000000e+00> : vector<16xf32>
    %15 = vector.multi_reduction <add>, %14, %cst_12 [1] : vector<16x8xf32> to vector<16xf32>
    %16 = vector.shape_cast %15 : vector<16xf32> to vector<16x1xf32>
    %17 = tpu.reciprocal %16 {approx = true} : vector<16x1xf32> -> vector<16x1xf32>
    %18 = vector.broadcast %17 : vector<16x1xf32> to vector<16x8xf32>
    %19 = arith.mulf %14, %18 : vector<16x8xf32>
    %cst_13 = arith.constant dense<0.000000e+00> : vector<16x8xf32>
    %20 = tpu.matmul %19, %8, %cst_13 {dimension_numbers = #tpu.dot_dimension_numbers<[1], [0], [0], [1], [0, 0, 1, 1], [], []>} : vector<16x8xf32>, vector<8x8xf32>, vector<16x8xf32> -> vector<16x8xf32>
    %21 = vector.extract_strided_slice %1 {offsets = [0, 8], sizes = [16, 8], strides = [1, 1]} : vector<16x32xf32> to vector<16x8xf32>
    %22 = vector.extract_strided_slice %3 {offsets = [0, 8], sizes = [8, 8], strides = [1, 1]} : vector<8x32xf32> to vector<8x8xf32>
    %23 = vector.extract_strided_slice %5 {offsets = [0, 8], sizes = [8, 8], strides = [1, 1]} : vector<8x32xf32> to vector<8x8xf32>
    %cst_14 = arith.constant dense<0.000000e+00> : vector<16x8xf32>
    %24 = tpu.matmul %21, %22, %cst_14 {dimension_numbers = #tpu.dot_dimension_numbers<[1], [1], [0], [0], [0, 0, 1, 0], [], []>} : vector<16x8xf32>, vector<8x8xf32>, vector<16x8xf32> -> vector<16x8xf32>
    %cst_15 = arith.constant dense<0xFF800000> : vector<16xf32>
    %25 = vector.multi_reduction <maximumf>, %24, %cst_15 [1] : vector<16x8xf32> to vector<16xf32>
    %26 = vector.shape_cast %25 : vector<16xf32> to vector<16x1xf32>
    %27 = vector.broadcast %26 : vector<16x1xf32> to vector<16x8xf32>
    %28 = arith.subf %24, %27 : vector<16x8xf32>
    %29 = math.exp %28 : vector<16x8xf32>
    %cst_16 = arith.constant dense<0.000000e+00> : vector<16xf32>
    %30 = vector.multi_reduction <add>, %29, %cst_16 [1] : vector<16x8xf32> to vector<16xf32>
    %31 = vector.shape_cast %30 : vector<16xf32> to vector<16x1xf32>
    %32 = tpu.reciprocal %31 {approx = true} : vector<16x1xf32> -> vector<16x1xf32>
    %33 = vector.broadcast %32 : vector<16x1xf32> to vector<16x8xf32>
    %34 = arith.mulf %29, %33 : vector<16x8xf32>
    %cst_17 = arith.constant dense<0.000000e+00> : vector<16x8xf32>
    %35 = tpu.matmul %34, %23, %cst_17 {dimension_numbers = #tpu.dot_dimension_numbers<[1], [0], [0], [1], [0, 0, 1, 1], [], []>} : vector<16x8xf32>, vector<8x8xf32>, vector<16x8xf32> -> vector<16x8xf32>
    %36 = vector.extract_strided_slice %1 {offsets = [0, 16], sizes = [16, 8], strides = [1, 1]} : vector<16x32xf32> to vector<16x8xf32>
    %37 = vector.extract_strided_slice %3 {offsets = [0, 16], sizes = [8, 8], strides = [1, 1]} : vector<8x32xf32> to vector<8x8xf32>
    %38 = vector.extract_strided_slice %5 {offsets = [0, 16], sizes = [8, 8], strides = [1, 1]} : vector<8x32xf32> to vector<8x8xf32>
    %cst_18 = arith.constant dense<0.000000e+00> : vector<16x8xf32>
    %39 = tpu.matmul %36, %37, %cst_18 {dimension_numbers = #tpu.dot_dimension_numbers<[1], [1], [0], [0], [0, 0, 1, 0], [], []>} : vector<16x8xf32>, vector<8x8xf32>, vector<16x8xf32> -> vector<16x8xf32>
    %cst_19 = arith.constant dense<0xFF800000> : vector<16xf32>
    %40 = vector.multi_reduction <maximumf>, %39, %cst_19 [1] : vector<16x8xf32> to vector<16xf32>
    %41 = vector.shape_cast %40 : vector<16xf32> to vector<16x1xf32>
    %42 = vector.broadcast %41 : vector<16x1xf32> to vector<16x8xf32>
    %43 = arith.subf %39, %42 : vector<16x8xf32>
    %44 = math.exp %43 : vector<16x8xf32>
    %cst_20 = arith.constant dense<0.000000e+00> : vector<16xf32>
    %45 = vector.multi_reduction <add>, %44, %cst_20 [1] : vector<16x8xf32> to vector<16xf32>
    %46 = vector.shape_cast %45 : vector<16xf32> to vector<16x1xf32>
    %47 = tpu.reciprocal %46 {approx = true} : vector<16x1xf32> -> vector<16x1xf32>
    %48 = vector.broadcast %47 : vector<16x1xf32> to vector<16x8xf32>
    %49 = arith.mulf %44, %48 : vector<16x8xf32>
    %cst_21 = arith.constant dense<0.000000e+00> : vector<16x8xf32>
    %50 = tpu.matmul %49, %38, %cst_21 {dimension_numbers = #tpu.dot_dimension_numbers<[1], [0], [0], [1], [0, 0, 1, 1], [], []>} : vector<16x8xf32>, vector<8x8xf32>, vector<16x8xf32> -> vector<16x8xf32>
    %51 = vector.extract_strided_slice %1 {offsets = [0, 24], sizes = [16, 8], strides = [1, 1]} : vector<16x32xf32> to vector<16x8xf32>
    %52 = vector.extract_strided_slice %3 {offsets = [0, 24], sizes = [8, 8], strides = [1, 1]} : vector<8x32xf32> to vector<8x8xf32>
    %53 = vector.extract_strided_slice %5 {offsets = [0, 24], sizes = [8, 8], strides = [1, 1]} : vector<8x32xf32> to vector<8x8xf32>
    %cst_22 = arith.constant dense<0.000000e+00> : vector<16x8xf32>
    %54 = tpu.matmul %51, %52, %cst_22 {dimension_numbers = #tpu.dot_dimension_numbers<[1], [1], [0], [0], [0, 0, 1, 0], [], []>} : vector<16x8xf32>, vector<8x8xf32>, vector<16x8xf32> -> vector<16x8xf32>
    %cst_23 = arith.constant dense<0xFF800000> : vector<16xf32>
    %55 = vector.multi_reduction <maximumf>, %54, %cst_23 [1] : vector<16x8xf32> to vector<16xf32>
    %56 = vector.shape_cast %55 : vector<16xf32> to vector<16x1xf32>
    %57 = vector.broadcast %56 : vector<16x1xf32> to vector<16x8xf32>
    %58 = arith.subf %54, %57 : vector<16x8xf32>
    %59 = math.exp %58 : vector<16x8xf32>
    %cst_24 = arith.constant dense<0.000000e+00> : vector<16xf32>
    %60 = vector.multi_reduction <add>, %59, %cst_24 [1] : vector<16x8xf32> to vector<16xf32>
    %61 = vector.shape_cast %60 : vector<16xf32> to vector<16x1xf32>
    %62 = tpu.reciprocal %61 {approx = true} : vector<16x1xf32> -> vector<16x1xf32>
    %63 = vector.broadcast %62 : vector<16x1xf32> to vector<16x8xf32>
    %64 = arith.mulf %59, %63 : vector<16x8xf32>
    %cst_25 = arith.constant dense<0.000000e+00> : vector<16x8xf32>
    %65 = tpu.matmul %64, %53, %cst_25 {dimension_numbers = #tpu.dot_dimension_numbers<[1], [0], [0], [1], [0, 0, 1, 1], [], []>} : vector<16x8xf32>, vector<8x8xf32>, vector<16x8xf32> -> vector<16x8xf32>
    %66 = tpu.concatenate %20, %35, %50, %65 in 1 : vector<16x8xf32>, vector<16x8xf32>, vector<16x8xf32>, vector<16x8xf32> -> vector<16x32xf32>
    %c0_26 = arith.constant 0 : index
    %c0_27 = arith.constant 0 : index
    %c0_28 = arith.constant 0 : index
    %67 = vector.load %arg5[%c0_26, %c0_27, %c0_28] : memref<1x16x32xf32, #tpu.memory_space<vmem>>, vector<1x16x32xf32>
    %68 = vector.shape_cast %67 : vector<1x16x32xf32> to vector<16x32xf32>
    %69 = vector.shape_cast %66 : vector<16x32xf32> to vector<1x16x32xf32>
    tpu.vector_store %arg5[%c0_26, %c0_27, %c0_28], %69 {strides = array<i32>} : memref<1x16x32xf32, #tpu.memory_space<vmem>>, vector<1x16x32xf32>,
    return
  }
  func.func @transform_0(%arg0: i32, %arg1: i32) -> (i32, i32, i32, i32) {
    %c0_i32 = arith.constant 0 : i32
    %c0_i32_0 = arith.constant 0 : i32
    %c0_i32_1 = arith.constant 0 : i32
    return %c0_i32, %arg0, %arg1, %c0_i32_0 : i32, i32, i32, i32
  }
  func.func @transform_1(%arg0: i32, %arg1: i32) -> (i32, i32, i32, i32) {
    %c0_i32 = arith.constant 0 : i32
    %c0_i32_0 = arith.constant 0 : i32
    %c0_i32_1 = arith.constant 0 : i32
    %c0_i32_2 = arith.constant 0 : i32
    return %c0_i32, %arg0, %c0_i32_0, %c0_i32_1 : i32, i32, i32, i32
  }
  func.func @transform_2(%arg0: i32, %arg1: i32) -> (i32, i32, i32, i32) {
    %c1_i32 = arith.constant 1 : i32
    %c0_i32 = arith.constant 0 : i32
    %c0_i32_0 = arith.constant 0 : i32
    %c0_i32_1 = arith.constant 0 : i32
    return %c1_i32, %arg0, %c0_i32, %c0_i32_0 : i32, i32, i32, i32
  }
  func.func @transform_3(%arg0: i32, %arg1: i32) -> (i32, i32, i32) {
    %c0_i32 = arith.constant 0 : i32
    %c0_i32_0 = arith.constant 0 : i32
    return %arg0, %arg1, %c0_i32 : i32, i32, i32
  }
}

module attributes {stable_mosaic.version = 11 : i64} {
  func.func @_compress_kernel(%arg0: i32, %arg1: i32, %arg2: i32, %arg3: memref<1x1x16x32xf32, #tpu.memory_space<vmem>>, %arg4: memref<1x8x16xf32, #tpu.memory_space<vmem>>, %arg5: memref<1x1x8x32xf32, #tpu.memory_space<vmem>>, %arg6: memref<8x32xf32, #tpu.memory_space<vmem>>) attributes {dimension_semantics = [#tpu.dimension_semantics<parallel>, #tpu.dimension_semantics<parallel>, #tpu.dimension_semantics<arbitrary>], iteration_bounds = array<i64: 2, 2, 1>, scalar_prefetch = 0 : i64, scratch_operands = 1 : i64, tpu.core_type = #tpu.core_type<tc>, window_params = [{transform_indices = @transform_0, window_bounds = array<i64: 1, 1, 16, 32>}, {transform_indices = @transform_1, window_bounds = array<i64: 1, 8, 16>}, {transform_indices = @transform_2, window_bounds = array<i64: 1, 1, 8, 32>}]} {
    %c0_i32 = arith.constant 0 : i32
    %0 = arith.cmpi eq, %arg2, %c0_i32 : i32
    %1 = arith.extui %0 : i1 to i32
    %c0_i32_0 = arith.constant 0 : i32
    %2 = arith.cmpi ne, %1, %c0_i32_0 : i32
    scf.if %2 {
      %cst_13 = arith.constant 0.000000e+00 : f32
      %14 = vector.broadcast %cst_13 : f32 to vector<8x32xf32>
      %c0_14 = arith.constant 0 : index
      %c0_15 = arith.constant 0 : index
      %15 = vector.load %arg6[%c0_14, %c0_15] : memref<8x32xf32, #tpu.memory_space<vmem>>, vector<8x32xf32>
      tpu.vector_store %arg6[%c0_14, %c0_15], %14 {strides = array<i32>} : memref<8x32xf32, #tpu.memory_space<vmem>>, vector<8x32xf32>,
    } else {
    }
    %c0 = arith.constant 0 : index
    %c0_1 = arith.constant 0 : index
    %3 = vector.load %arg6[%c0, %c0_1] : memref<8x32xf32, #tpu.memory_space<vmem>>, vector<8x32xf32>
    %c0_2 = arith.constant 0 : index
    %c0_3 = arith.constant 0 : index
    %c0_4 = arith.constant 0 : index
    %4 = vector.load %arg4[%c0_2, %c0_3, %c0_4] : memref<1x8x16xf32, #tpu.memory_space<vmem>>, vector<1x8x16xf32>
    %5 = vector.shape_cast %4 : vector<1x8x16xf32> to vector<8x16xf32>
    %c0_5 = arith.constant 0 : index
    %c0_6 = arith.constant 0 : index
    %c0_7 = arith.constant 0 : index
    %c0_8 = arith.constant 0 : index
    %6 = vector.load %arg3[%c0_5, %c0_6, %c0_7, %c0_8] : memref<1x1x16x32xf32, #tpu.memory_space<vmem>>, vector<1x1x16x32xf32>
    %7 = vector.shape_cast %6 : vector<1x1x16x32xf32> to vector<16x32xf32>
    %cst = arith.constant dense<0.000000e+00> : vector<8x32xf32>
    %8 = tpu.matmul %5, %7, %cst {dimension_numbers = #tpu.dot_dimension_numbers<[1], [0], [0], [1], [0, 0, 1, 1], [], []>} : vector<8x16xf32>, vector<16x32xf32>, vector<8x32xf32> -> vector<8x32xf32>
    %9 = arith.addf %3, %8 : vector<8x32xf32>
    %c0_9 = arith.constant 0 : index
    %c0_10 = arith.constant 0 : index
    %10 = vector.load %arg6[%c0_9, %c0_10] : memref<8x32xf32, #tpu.memory_space<vmem>>, vector<8x32xf32>
    tpu.vector_store %arg6[%c0_9, %c0_10], %9 {strides = array<i32>} : memref<8x32xf32, #tpu.memory_space<vmem>>, vector<8x32xf32>,
    %c0_i32_11 = arith.constant 0 : i32
    %11 = arith.cmpi eq, %arg2, %c0_i32_11 : i32
    %12 = arith.extui %11 : i1 to i32
    %c0_i32_12 = arith.constant 0 : i32
    %13 = arith.cmpi ne, %12, %c0_i32_12 : i32
    scf.if %13 {
      %c0_13 = arith.constant 0 : index
      %c0_14 = arith.constant 0 : index
      %14 = vector.load %arg6[%c0_13, %c0_14] : memref<8x32xf32, #tpu.memory_space<vmem>>, vector<8x32xf32>
      %c0_15 = arith.constant 0 : index
      %c0_16 = arith.constant 0 : index
      %c0_17 = arith.constant 0 : index
      %c0_18 = arith.constant 0 : index
      %15 = vector.load %arg5[%c0_15, %c0_16, %c0_17, %c0_18] : memref<1x1x8x32xf32, #tpu.memory_space<vmem>>, vector<1x1x8x32xf32>
      %16 = vector.shape_cast %15 : vector<1x1x8x32xf32> to vector<8x32xf32>
      %17 = vector.shape_cast %14 : vector<8x32xf32> to vector<1x1x8x32xf32>
      tpu.vector_store %arg5[%c0_15, %c0_16, %c0_17, %c0_18], %17 {strides = array<i32>} : memref<1x1x8x32xf32, #tpu.memory_space<vmem>>, vector<1x1x8x32xf32>,
    } else {
    }
    return
  }
  func.func @transform_0(%arg0: i32, %arg1: i32, %arg2: i32) -> (i32, i32, i32, i32) {
    %c1_i32 = arith.constant 1 : i32
    %0 = arith.addi %arg0, %c1_i32 : i32
    %c0_i32 = arith.constant 0 : i32
    %c0_i32_0 = arith.constant 0 : i32
    return %0, %arg1, %arg2, %c0_i32 : i32, i32, i32, i32
  }
  func.func @transform_1(%arg0: i32, %arg1: i32, %arg2: i32) -> (i32, i32, i32) {
    %c0_i32 = arith.constant 0 : i32
    %c0_i32_0 = arith.constant 0 : i32
    return %arg0, %c0_i32, %arg2 : i32, i32, i32
  }
  func.func @transform_2(%arg0: i32, %arg1: i32, %arg2: i32) -> (i32, i32, i32, i32) {
    %c0_i32 = arith.constant 0 : i32
    %c0_i32_0 = arith.constant 0 : i32
    %c0_i32_1 = arith.constant 0 : i32
    return %arg0, %arg1, %c0_i32, %c0_i32_0 : i32, i32, i32, i32
  }
}

module attributes {stable_mosaic.version = 11 : i64} {
  func.func @_stacked_linear_kernel(%arg0: i32, %arg1: i32, %arg2: i32, %arg3: i32, %arg4: memref<32x32xf32, #tpu.memory_space<vmem>>, %arg5: memref<1x32x32xf32, #tpu.memory_space<vmem>>, %arg6: memref<1x32x32xf32, #tpu.memory_space<vmem>>, %arg7: memref<32x32xf32, #tpu.memory_space<vmem>>) attributes {dimension_semantics = [#tpu.dimension_semantics<parallel>, #tpu.dimension_semantics<parallel>, #tpu.dimension_semantics<parallel>, #tpu.dimension_semantics<arbitrary>], iteration_bounds = array<i64: 1, 1, 1, 1>, scalar_prefetch = 0 : i64, scratch_operands = 1 : i64, tpu.core_type = #tpu.core_type<tc>, window_params = [{transform_indices = @transform_0, window_bounds = array<i64: 32, 32>}, {transform_indices = @transform_1, window_bounds = array<i64: 1, 32, 32>}, {transform_indices = @transform_2, window_bounds = array<i64: 1, 32, 32>}]} {
    %c0_i32 = arith.constant 0 : i32
    %0 = arith.cmpi eq, %arg3, %c0_i32 : i32
    %1 = arith.extui %0 : i1 to i32
    %c0_i32_0 = arith.constant 0 : i32
    %2 = arith.cmpi ne, %1, %c0_i32_0 : i32
    scf.if %2 {
      %cst_11 = arith.constant 0.000000e+00 : f32
      %13 = vector.broadcast %cst_11 : f32 to vector<32x32xf32>
      %c0_12 = arith.constant 0 : index
      %c0_13 = arith.constant 0 : index
      %14 = vector.load %arg7[%c0_12, %c0_13] : memref<32x32xf32, #tpu.memory_space<vmem>>, vector<32x32xf32>
      tpu.vector_store %arg7[%c0_12, %c0_13], %13 {strides = array<i32>} : memref<32x32xf32, #tpu.memory_space<vmem>>, vector<32x32xf32>,
    } else {
    }
    %c0 = arith.constant 0 : index
    %c0_1 = arith.constant 0 : index
    %3 = vector.load %arg7[%c0, %c0_1] : memref<32x32xf32, #tpu.memory_space<vmem>>, vector<32x32xf32>
    %c0_2 = arith.constant 0 : index
    %c0_3 = arith.constant 0 : index
    %4 = vector.load %arg4[%c0_2, %c0_3] : memref<32x32xf32, #tpu.memory_space<vmem>>, vector<32x32xf32>
    %c0_4 = arith.constant 0 : index
    %c0_5 = arith.constant 0 : index
    %c0_6 = arith.constant 0 : index
    %5 = vector.load %arg5[%c0_4, %c0_5, %c0_6] : memref<1x32x32xf32, #tpu.memory_space<vmem>>, vector<1x32x32xf32>
    %6 = vector.shape_cast %5 : vector<1x32x32xf32> to vector<32x32xf32>
    %cst = arith.constant dense<0.000000e+00> : vector<32x32xf32>
    %7 = tpu.matmul %4, %6, %cst {dimension_numbers = #tpu.dot_dimension_numbers<[1], [0], [0], [1], [0, 0, 1, 1], [], []>} : vector<32x32xf32>, vector<32x32xf32>, vector<32x32xf32> -> vector<32x32xf32>
    %8 = arith.addf %3, %7 : vector<32x32xf32>
    %c0_7 = arith.constant 0 : index
    %c0_8 = arith.constant 0 : index
    %9 = vector.load %arg7[%c0_7, %c0_8] : memref<32x32xf32, #tpu.memory_space<vmem>>, vector<32x32xf32>
    tpu.vector_store %arg7[%c0_7, %c0_8], %8 {strides = array<i32>} : memref<32x32xf32, #tpu.memory_space<vmem>>, vector<32x32xf32>,
    %c0_i32_9 = arith.constant 0 : i32
    %10 = arith.cmpi eq, %arg3, %c0_i32_9 : i32
    %11 = arith.extui %10 : i1 to i32
    %c0_i32_10 = arith.constant 0 : i32
    %12 = arith.cmpi ne, %11, %c0_i32_10 : i32
    scf.if %12 {
      %c0_11 = arith.constant 0 : index
      %c0_12 = arith.constant 0 : index
      %13 = vector.load %arg7[%c0_11, %c0_12] : memref<32x32xf32, #tpu.memory_space<vmem>>, vector<32x32xf32>
      %c0_13 = arith.constant 0 : index
      %c0_14 = arith.constant 0 : index
      %c0_15 = arith.constant 0 : index
      %14 = vector.load %arg6[%c0_13, %c0_14, %c0_15] : memref<1x32x32xf32, #tpu.memory_space<vmem>>, vector<1x32x32xf32>
      %15 = vector.shape_cast %14 : vector<1x32x32xf32> to vector<32x32xf32>
      %16 = vector.shape_cast %13 : vector<32x32xf32> to vector<1x32x32xf32>
      tpu.vector_store %arg6[%c0_13, %c0_14, %c0_15], %16 {strides = array<i32>} : memref<1x32x32xf32, #tpu.memory_space<vmem>>, vector<1x32x32xf32>,
    } else {
    }
    return
  }
  func.func @transform_0(%arg0: i32, %arg1: i32, %arg2: i32, %arg3: i32) -> (i32, i32) {
    %c0_i32 = arith.constant 0 : i32
    return %arg1, %arg3 : i32, i32
  }
  func.func @transform_1(%arg0: i32, %arg1: i32, %arg2: i32, %arg3: i32) -> (i32, i32, i32) {
    %c0_i32 = arith.constant 0 : i32
    return %arg0, %arg3, %arg2 : i32, i32, i32
  }
  func.func @transform_2(%arg0: i32, %arg1: i32, %arg2: i32, %arg3: i32) -> (i32, i32, i32) {
    %c0_i32 = arith.constant 0 : i32
    return %arg0, %arg1, %arg2 : i32, i32, i32
  }
}

</mosaic_0001>

<llo_original>
// kernel: linformer_attention.4
$region0: #{linformer_attention.4}
  #allocation0 [shape = 'u32[]', space=smem, size = 0x4, offset = 0x4, fixed_abs, tag = 'smem constant byte address 0x4 - core index']
  #allocation1 [shape = 'u32[144,128]{1,0:T(1,128)}', space=vmem, size = 0x12000, scoped, tag = 'internal scratch']
  #allocation2 [shape = 'f32[32,32]{1,0:T(8,128)}', space=vmem, size = 0x4000, scoped, tag = 'scratch operand']
  %s0 = inlined_call_operand.hbm [shape: f32[32,32], index: 0, kind: input, shape index: {}]
  %s1 = inlined_call_operand.hbm [shape: f32[3,32,32], index: 1, kind: input, shape index: {}]
  %s2 = inlined_call_operand.vmem [shape: f32[3,32,32], index: 2, kind: output, shape index: {}]
  %s3 = sld [smem:[#allocation0]]
  $region57: #{linformer_attention.4} parent=0
    _
  %s5 = ssub.s32 1, %s3
  %s6 = scalar_select 0, %s5, %s3
  $region1: #{linformer_attention.4} parent=0
    #allocation3 [shape = 'u8[16384]{0}', space=vmem, size = 0x4000, scoped, tag = 'input window, operand 0, single buffered']
    #allocation4 [shape = 's32[2]{0}', space=sflag, size = 0x8, scoped, tag = 'scoped memory for linformer_attention.4']
    #allocation5 [shape = 'u8[32768]{0}', space=vmem, size = 0x8000, scoped, tag = 'input window, operand 1']
    #allocation6 [shape = 's32[2]{0}', space=sflag, size = 0x8, scoped, tag = 'scoped memory for linformer_attention.4']
    %7 = vsyncpa [#allocation4], 0
    %8 = vsyncpa [#allocation6], 0
    %s9 = scalar_lea.sflag [#allocation6], 1
    %10 = vsyncpa %s9, 0
    loop: start=0, step=1, limit=5
    $region2: #{linformer_attention.4} parent=1 // loop_pre_header
      _
    $region3: #{linformer_attention.4} parent=1 // loop_header
      %s12 = sphi 0, %s16
      %p13 = scmp.ge.s32.totalorder %s12, 5
      %s19 = sphi 0, %s45
      %s20 = sphi 0, %s41
      %s21 = sphi 0, %s37
      %s22 = sphi 0, %s33
      %s23 = sphi 0, %s19
      %s24 = sphi 0, %s20
      %s25 = sphi 0, %s21
      %s26 = sphi 0, %s22
      %s27 = sphi 0, %s23
      %s28 = sphi 0, %s24
      %s29 = sphi 0, %s25
      %s30 = sphi 0, %s26
      %s50 = sphi 0, %s52
      %s53 = sphi 0, %s50
      %s54 = sphi 0, %s53
      %s70 = sphi 0, %s54
      %s80 = sphi 0, %s82
      %s83 = sphi 0, %s80
      %s84 = sphi 0, %s83
      %s100 = sphi 0, %s84
      %s110 = sphi 0, %s112
      %s113 = sphi 0, %s110
      %s114 = sphi 0, %s113
      %s130 = sphi 0, %s114
    $region4: #{linformer_attention.4} parent=1 // loop_header_branch
      %15 = sbr.rel (%p13) target = $region8
    $region5: #{linformer_attention.4} parent=1 // loop_body
      %s17 = ssub.s32 %s12, 1
      %s18 = ssub.s32 %s12, 2
      %s31 = sadd.s32 1, %s22
      %p32 = scmp.ge.s32.totalorder %s31, 1
      %s33 = scalar_select %p32, 0, %s31
      %s34 = sadd.s32 1, %s21
      %s35 = scalar_select %p32, %s34, %s21
      %p36 = scmp.ge.s32.totalorder %s35, 1
      %s37 = scalar_select %p36, 0, %s35
      %s38 = sadd.s32 1, %s20
      %s39 = scalar_select %p36, %s38, %s20
      %p40 = scmp.ge.s32.totalorder %s39, 1
      %s41 = scalar_select %p40, 0, %s39
      %s42 = sadd.s32 1, %s19
      %s43 = scalar_select %p40, %s42, %s19
      %p44 = scmp.ge.s32.totalorder %s43, 3
      %s45 = scalar_select %p44, 0, %s43
      %s46 = ssub.s32 %s20, %s41
      %s47 = ssub.s32 %s22, %s33
      %s48 = sor.u32 %s46, %s47
      %p49 = scmp.eq.s32.totalorder %s48, 0
      %s51 = sadd.s32 %s50, 1
      %s52 = scalar_select %p49, %s50, %s51
      %p55 = pneg %p49
      %p56 = scmp.eq.s32.totalorder %s12, 2
      %p57 = por %p55, %p56
      %p58 = scmp.ne.s32.totalorder %s50, %s53
      %p59 = scmp.eq.s32.totalorder %s12, 0
      %p60 = por %p58, %p59
      %p61 = scmp.ne.s32.totalorder %s50, %s53
      %p62 = scmp.eq.s32.totalorder %s17, 2
      %p63 = por %p61, %p62
      %p64 = scmp.ne.s32.totalorder %s53, %s54
      %p65 = scmp.eq.s32.totalorder %s17, 0
      %p66 = por %p64, %p65
      %p67 = scmp.ne.s32.totalorder %s53, %s54
      %p68 = scmp.eq.s32.totalorder %s18, 2
      %p69 = por %p67, %p68
      %p71 = scmp.ne.s32.totalorder %s54, %s70
      %p72 = scmp.eq.s32.totalorder %s18, 0
      %p73 = por %p71, %p72
      %s74 = ssub.s32 %s19, %s45
      %s75 = ssub.s32 %s22, %s33
      %s76 = sor.u32 %s74, %s75
      %s77 = ssub.s32 %s21, %s37
      %s78 = sor.u32 %s76, %s77
      %p79 = scmp.eq.s32.totalorder %s78, 0
      %s81 = sadd.s32 %s80, 1
      %s82 = scalar_select %p79, %s80, %s81
      %p85 = pneg %p79
      %p86 = scmp.eq.s32.totalorder %s12, 2
      %p87 = por %p85, %p86
      %p88 = scmp.ne.s32.totalorder %s80, %s83
      %p89 = scmp.eq.s32.totalorder %s12, 0
      %p90 = por %p88, %p89
      %p91 = scmp.ne.s32.totalorder %s80, %s83
      %p92 = scmp.eq.s32.totalorder %s17, 2
      %p93 = por %p91, %p92
      %p94 = scmp.ne.s32.totalorder %s83, %s84
      %p95 = scmp.eq.s32.totalorder %s17, 0
      %p96 = por %p94, %p95
      %p97 = scmp.ne.s32.totalorder %s83, %s84
      %p98 = scmp.eq.s32.totalorder %s18, 2
      %p99 = por %p97, %p98
      %p101 = scmp.ne.s32.totalorder %s84, %s100
      %p102 = scmp.eq.s32.totalorder %s18, 0
      %p103 = por %p101, %p102
      %s104 = ssub.s32 %s19, %s45
      %s105 = ssub.s32 %s20, %s41
      %s106 = sor.u32 %s104, %s105
      %s107 = ssub.s32 %s21, %s37
      %s108 = sor.u32 %s106, %s107
      %p109 = scmp.eq.s32.totalorder %s108, 0
      %s111 = sadd.s32 %s110, 1
      %s112 = scalar_select %p109, %s110, %s111
      %p115 = pneg %p109
      %p116 = scmp.eq.s32.totalorder %s12, 2
      %p117 = por %p115, %p116
      %p118 = scmp.ne.s32.totalorder %s110, %s113
      %p119 = scmp.eq.s32.totalorder %s12, 0
      %p120 = por %p118, %p119
      %p121 = scmp.ne.s32.totalorder %s110, %s113
      %p122 = scmp.eq.s32.totalorder %s17, 2
      %p123 = por %p121, %p122
      %p124 = scmp.ne.s32.totalorder %s113, %s114
      %p125 = scmp.eq.s32.totalorder %s17, 0
      %p126 = por %p124, %p125
      %p127 = scmp.ne.s32.totalorder %s113, %s114
      %p128 = scmp.eq.s32.totalorder %s18, 2
      %p129 = por %p127, %p128
      %p131 = scmp.ne.s32.totalorder %s114, %s130
      %p132 = scmp.eq.s32.totalorder %s18, 0
      %p133 = por %p131, %p132
      %p134 = scmp.le.s32.totalorder 1, %s12
      %p135 = scmp.lt.s32.totalorder %s12, 4
      %p136 = pnand %p134, %p135
      %p137 = pneg %p136
      // Predicated region
      $region9: #{linformer_attention.4} parent=5 // pred_check
        _
      $region10: #{linformer_attention.4} parent=5 // pred_check_branch
        %139 = sbr.rel (%p136) target = $region12
      $region11: #{linformer_attention.4} parent=5 // pred_region
        %s140 = ssub.s32 %s12, 1
        // Predicated region
        $region13: #{linformer_attention.4} parent=11 // pred_check
          %p141 = pneg %p66
        $region14: #{linformer_attention.4} parent=11 // pred_check_branch
          %143 = sbr.rel (%p141) target = $region16
        $region15: #{linformer_attention.4} parent=11 // pred_region
          %s144 = smul.u32 4, %s24
          %s146 = ssub.s32 512, 512
          %147 = vsyncadd [#allocation4], %s146
          %s148 = sadd.s32 %s26, %s144
          %s149 = smul.addr %s148, 128
          %s150 = scalar_lea.hbm %s0, %s149
          %s151 = sshll.u32 [#allocation3], 4
          %s152 = int_to_ptr.vmem [resolvable:$true] %s151
          %157 = dma.hbm_to_vmem [thread:$0]  %s150, 512, %s152, [#allocation4], 128, 128, 8
        $region16: #{linformer_attention.4} parent=11 // pred_fallthru
          _
      $region12: #{linformer_attention.4} parent=5 // pred_fallthru
        _
      %p158 = scmp.lt.s32.totalorder %s12, 3
      // Predicated region
      $region17: #{linformer_attention.4} parent=5 // pred_check
        %p159 = pneg %p158
      $region18: #{linformer_attention.4} parent=5 // pred_check_branch
        %161 = sbr.rel (%p159) target = $region20
      $region19: #{linformer_attention.4} parent=5 // pred_region
        // Predicated region
        $region21: #{linformer_attention.4} parent=19 // pred_check
          %p162 = pneg %p90
        $region22: #{linformer_attention.4} parent=19 // pred_check_branch
          %164 = sbr.rel (%p162) target = $region24
        $region23: #{linformer_attention.4} parent=19 // pred_region
          %s165 = sand.u32 %s80, 1
          %s166 = scalar_lea.sflag [#allocation6], %s165
          %s167 = sand.u32 %s80, 1
          %s168 = smul.addr %s167, 32
          %s169 = scalar_lea.vmem [#allocation5], %s168
          %s170 = smul.u32 4, %s22
          %s172 = ssub.s32 512, 512
          %173 = vsyncadd %s166, %s172
          %s174 = sadd.s32 %s21, %s170
          %s175 = smul.addr %s19, 4
          %s176 = sadd.s32 %s174, %s175
          %s177 = smul.addr %s176, 128
          %s178 = scalar_lea.hbm %s1, %s177
          %s179 = sshll.u32 %s169, 4
          %s180 = int_to_ptr.vmem [resolvable:$true] %s179
          %185 = dma.hbm_to_vmem [thread:$0]  %s178, 512, %s180, %s166, 128, 128, 8
        $region24: #{linformer_attention.4} parent=19 // pred_fallthru
          _
      $region20: #{linformer_attention.4} parent=5 // pred_fallthru
        _
      %p186 = scmp.le.s32.totalorder 1, %s12
      %p187 = scmp.lt.s32.totalorder %s12, 4
      %p188 = pnand %p186, %p187
      %p189 = pneg %p188
      // Predicated region
      $region25: #{linformer_attention.4} parent=5 // pred_check
        _
      $region26: #{linformer_attention.4} parent=5 // pred_check_branch
        %191 = sbr.rel (%p188) target = $region28
      $region27: #{linformer_attention.4} parent=5 // pred_region
        %s192 = ssub.s32 %s12, 1
        // Predicated region
        $region29: #{linformer_attention.4} parent=27 // pred_check
          %p193 = pneg %p66
        $region30: #{linformer_attention.4} parent=27 // pred_check_branch
          %195 = sbr.rel (%p193) target = $region32
        $region31: #{linformer_attention.4} parent=27 // pred_region
          %196 = dma.done [#allocation4], 512
        $region32: #{linformer_attention.4} parent=27 // pred_fallthru
          _
        %s197 = sand.u32 %s83, 1
        %s198 = scalar_lea.sflag [#allocation6], %s197
        %s199 = sand.u32 %s83, 1
        %s200 = smul.addr %s199, 32
        %s201 = scalar_lea.vmem [#allocation5], %s200
        // Predicated region
        $region33: #{linformer_attention.4} parent=27 // pred_check
          %p202 = pneg %p96
        $region34: #{linformer_attention.4} parent=27 // pred_check_branch
          %204 = sbr.rel (%p202) target = $region36
        $region35: #{linformer_attention.4} parent=27 // pred_region
          %205 = dma.done %s198, 512
        $region36: #{linformer_attention.4} parent=27 // pred_fallthru
          _
        %p206 = pneg %p66
        %p207 = pneg %p63
        %s208 = sand.u32 %s83, 1
        %s209 = scalar_lea.sflag [#allocation6], %s208
        %s210 = sand.u32 %s83, 1
        %s211 = smul.addr %s210, 32
        %s212 = scalar_lea.vmem [#allocation5], %s211
        %p213 = pneg %p96
        %p214 = pneg %p93
        %p215 = pneg %p126
        %p216 = pneg %p123
        %s217 = smul.u32 4, %s24
        %p218 = scmp.lt.s32.totalorder %s23, 2
        %s219 = scalar_select %p218, %s23, 2
        %p220 = scmp.lt.s32.totalorder %s217, 3
        %s221 = scalar_select %p220, %s217, 3
        %p222 = scmp.lt.s32.totalorder %s25, 0
        %s223 = scalar_select %p222, %s25, 0
        %s224 = sadd.s32 %s223, %s221
        %s225 = smul.addr %s219, 4
        %s226 = sadd.s32 %s224, %s225
        %s227 = smul.addr %s226, 8
        %s228 = scalar_lea.vmem %s2, %s227
        %s229 = smul.u32 4, %s24
        %s230 = smul.u32 4, %s26
        %s231 = smul.u32 4, %s24
        %p232 = scmp.lt.s32.totalorder %s23, 2
        %s233 = scalar_select %p232, %s23, 2
        %p234 = scmp.lt.s32.totalorder %s231, 3
        %s235 = scalar_select %p234, %s231, 3
        %p236 = scmp.lt.s32.totalorder %s25, 0
        %s237 = scalar_select %p236, %s25, 0
        %s238 = sadd.s32 %s237, %s235
        %s239 = smul.addr %s233, 4
        %s240 = sadd.s32 %s238, %s239
        %s241 = smul.addr %s240, 8
        %s242 = scalar_lea.vmem %s2, %s241
        %s243 = smul.u32 4, %s24
        %p244 = scmp.eq.s32.totalorder %s26, 0
        // Predicated region
        $region37: #{linformer_attention.4} parent=27 // pred_check
          %p245 = pneg %p244
        $region38: #{linformer_attention.4} parent=27 // pred_check_branch
          %247 = sbr.rel (%p245) target = $region40
        $region39: #{linformer_attention.4} parent=27 // pred_region
          %vm248 = vcmask 261120
          %249 = vst.msk [vmem:[#allocation2] sm:$0xff] %vm248, 0.0
          %250 = vst.msk [vmem:[#allocation2 + $0x8] sm:$0xff] %vm248, 0.0
          %251 = vst.msk [vmem:[#allocation2 + $0x10] sm:$0xff] %vm248, 0.0
          %252 = vst.msk [vmem:[#allocation2 + $0x18] sm:$0xff] %vm248, 0.0
        $region40: #{linformer_attention.4} parent=27 // pred_fallthru
          _
        %v253 = vld [vmem:[#allocation2] sm:$0xff]
        %v254 = vld [vmem:[#allocation2 + $0x8] sm:$0xff]
        %v255 = vld [vmem:[#allocation2 + $0x10] sm:$0xff]
        %v256 = vld [vmem:[#allocation2 + $0x18] sm:$0xff]
        %v257 = vld [vmem:[#allocation3] sm:$0xff]
        %v258 = vld [vmem:[#allocation3 + $0x8] sm:$0xff]
        %v259 = vld [vmem:[#allocation3 + $0x10] sm:$0xff]
        %v260 = vld [vmem:[#allocation3 + $0x18] sm:$0xff]
        %v261 = vld [vmem:[%s201] sm:$0xff]
        %v262 = vld [vmem:[%s201 + $0x8] sm:$0xff]
        %v263 = vld [vmem:[%s201 + $0x10] sm:$0xff]
        %v264 = vld [vmem:[%s201 + $0x18] sm:$0xff]
        %vm265 = vcmask 261120
        %v267 = vsel %vm265, %v257, 0
        %v270 = vsel %vm265, %v258, 0
        %v273 = vsel %vm265, %v259, 0
        %v276 = vsel %vm265, %v260, 0
        %278 = vmatprep.subr.mxu0 0.0
        %279 = vmatpush1.msra.mxu0 %v261
        %280 = vmatprep.subr.mxu0 0.0
        %281 = vmatpush1.msra.mxu0 %v262
        %282 = vmatprep.subr.mxu0 0.0
        %283 = vmatpush1.msra.mxu0 %v263
        %284 = vmatprep.subr.mxu0 0.0
        %285 = vmatpush1.msra.mxu0 %v264
        %286 = vmatprep.subr.mxu0 0.0
        %287 = vmatpush1.msra.mxu0 0.0
        %288 = vmatprep.subr.mxu0 0.0
        %289 = vmatpush1.msra.mxu0 0.0
        %290 = vmatprep.subr.mxu0 0.0
        %291 = vmatpush1.msra.mxu0 0.0
        %292 = vmatprep.subr.mxu0 0.0
        %293 = vmatpush1.msra.mxu0 0.0
        %294 = vmatprep.subr.mxu0 0.0
        %295 = vmatpush1.msra.mxu0 0.0
        %296 = vmatprep.subr.mxu0 0.0
        %297 = vmatpush1.msra.mxu0 0.0
        %298 = vmatprep.subr.mxu0 0.0
        %299 = vmatpush1.msra.mxu0 0.0
        %300 = vmatprep.subr.mxu0 0.0
        %301 = vmatpush1.msra.mxu0 0.0
        %302 = vmatprep.subr.mxu0 0.0
        %303 = vmatpush1.msra.mxu0 0.0
        %304 = vmatprep.subr.mxu0 0.0
        %305 = vmatpush1.msra.mxu0 0.0
        %306 = vmatprep.subr.mxu0 0.0
        %307 = vmatpush1.msra.mxu0 0.0
        %308 = vmatprep.subr.mxu0 0.0
        %309 = vmatpush1.msra.mxu0 0.0
        %310 = vmatprep.subr.mxu0 0.0
        %311 = vmatpush1.msra.mxu0 0.0
        %312 = vmatprep.subr.mxu0 0.0
        %313 = vmatpush1.msra.mxu0 0.0
        %314 = vmatprep.subr.mxu0 0.0
        %315 = vmatpush1.msra.mxu0 0.0
        %316 = vmatprep.subr.mxu0 0.0
        %317 = vmatpush1.msra.mxu0 0.0
        %318 = vmatprep.subr.mxu0 0.0
        %319 = vmatpush1.msra.mxu0 0.0
        %320 = vmatprep.subr.mxu0 0.0
        %321 = vmatpush1.msra.mxu0 0.0
        %322 = vmatprep.subr.mxu0 0.0
        %323 = vmatpush1.msra.mxu0 0.0
        %324 = vmatprep.subr.mxu0 0.0
        %325 = vmatpush1.msra.mxu0 0.0
        %326 = vmatprep.subr.mxu0 0.0
        %327 = vmatpush1.msra.mxu0 0.0
        %328 = vmatprep.subr.mxu0 0.0
        %329 = vmatpush1.msra.mxu0 0.0
        %330 = vmatprep.subr.mxu0 0.0
        %331 = vmatpush1.msra.mxu0 0.0
        %332 = vmatprep.subr.mxu0 0.0
        %333 = vmatpush1.msra.mxu0 0.0
        %334 = vmatprep.subr.mxu0 0.0
        %335 = vmatpush1.msra.mxu0 0.0
        %336 = vmatprep.subr.mxu0 0.0
        %337 = vmatpush1.msra.mxu0 0.0
        %338 = vmatprep.subr.mxu0 0.0
        %339 = vmatpush1.msra.mxu0 0.0
        %340 = vmatprep.subr.mxu0 0.0
        %341 = vmatpush1.msra.mxu0 0.0
        %342 = vmatprep.mubr.f32.mxu0 0.0
        %343 = vmatmul.mubr.f32.gmra.mrb[0].mxu0 %v267
        %v344 = vpop.f32.mrb[0].mxu0
        %v345 = vadd.f32 0.0, %v344
        %v346 = vpop.f32.mrb[0].mxu0
        %347 = vmatprep.mubr.f32.mxu0 0.0
        %348 = vmatmul.mubr.f32.gmra.mrb[0].mxu0 %v270
        %v349 = vpop.f32.mrb[0].mxu0
        %v350 = vadd.f32 0.0, %v349
        %v351 = vpop.f32.mrb[0].mxu0
        %352 = vmatprep.mubr.f32.mxu0 0.0
        %353 = vmatmul.mubr.f32.gmra.mrb[0].mxu0 %v273
        %v354 = vpop.f32.mrb[0].mxu0
        %v355 = vadd.f32 0.0, %v354
        %v356 = vpop.f32.mrb[0].mxu0
        %357 = vmatprep.mubr.f32.mxu0 0.0
        %358 = vmatmul.mubr.f32.gmra.mrb[0].mxu0 %v276
        %v359 = vpop.f32.mrb[0].mxu0
        %v360 = vadd.f32 0.0, %v359
        %v361 = vpop.f32.mrb[0].mxu0
        %362 = vdwg.mxu0
        %v363 = vadd.f32 %v253, %v345
        %v364 = vadd.f32 %v254, %v350
        %v365 = vadd.f32 %v255, %v355
        %v366 = vadd.f32 %v256, %v360
        %367 = vst.msk [vmem:[#allocation2] sm:$0xff] %vm265, %v363
        %368 = vst.msk [vmem:[#allocation2 + $0x8] sm:$0xff] %vm265, %v364
        %369 = vst.msk [vmem:[#allocation2 + $0x10] sm:$0xff] %vm265, %v365
        %370 = vst.msk [vmem:[#allocation2 + $0x18] sm:$0xff] %vm265, %v366
        // Predicated region
        $region41: #{linformer_attention.4} parent=27 // pred_check
          %p371 = pneg %p244
        $region42: #{linformer_attention.4} parent=27 // pred_check_branch
          %373 = sbr.rel (%p371) target = $region44
        $region43: #{linformer_attention.4} parent=27 // pred_region
          %v374 = vld [vmem:[#allocation2] sm:$0xff]
          %v375 = vld [vmem:[#allocation2 + $0x8] sm:$0xff]
          %v376 = vld [vmem:[#allocation2 + $0x10] sm:$0xff]
          %v377 = vld [vmem:[#allocation2 + $0x18] sm:$0xff]
          %378 = vst.msk [vmem:[%s242] sm:$0xff] %vm265, %v374
          %379 = vst.msk [vmem:[%s242 + $0x8] sm:$0xff] %vm265, %v375
          %380 = vst.msk [vmem:[%s242 + $0x10] sm:$0xff] %vm265, %v376
          %381 = vst.msk [vmem:[%s242 + $0x18] sm:$0xff] %vm265, %v377
        $region44: #{linformer_attention.4} parent=27 // pred_fallthru
          _
        %s382 = smul.u32 4, %s24
        %p383 = scmp.lt.s32.totalorder %s23, 2
        %s384 = scalar_select %p383, %s23, 2
        %p385 = scmp.lt.s32.totalorder %s382, 3
        %s386 = scalar_select %p385, %s382, 3
        %p387 = scmp.lt.s32.totalorder %s25, 0
        %s388 = scalar_select %p387, %s25, 0
        %s389 = sadd.s32 %s388, %s386
        %s390 = smul.addr %s384, 4
        %s391 = sadd.s32 %s389, %s390
        %s392 = smul.addr %s391, 8
        %s393 = scalar_lea.vmem %s2, %s392
        // Predicated region
        $region45: #{linformer_attention.4} parent=27 // pred_check
          %p394 = pneg %p123
        $region46: #{linformer_attention.4} parent=27 // pred_check_branch
          %396 = sbr.rel (%p394) target = $region48
        $region47: #{linformer_attention.4} parent=27 // pred_region
          %s397 = smul.u32 4, %s24
        $region48: #{linformer_attention.4} parent=27 // pred_fallthru
          _
      $region28: #{linformer_attention.4} parent=5 // pred_fallthru
        _
      %p398 = scmp.le.s32.totalorder 2, %s12
      // Predicated region
      $region49: #{linformer_attention.4} parent=5 // pred_check
        %p399 = pneg %p398
      $region50: #{linformer_attention.4} parent=5 // pred_check_branch
        %401 = sbr.rel (%p399) target = $region52
      $region51: #{linformer_attention.4} parent=5 // pred_region
        %s402 = ssub.s32 %s12, 2
        // Predicated region
        $region53: #{linformer_attention.4} parent=51 // pred_check
          %p403 = pneg %p129
        $region54: #{linformer_attention.4} parent=51 // pred_check_branch
          %405 = sbr.rel (%p403) target = $region56
        $region55: #{linformer_attention.4} parent=51 // pred_region
          %s406 = smul.u32 4, %s28
          %p407 = scmp.lt.s32.totalorder %s27, 2
          %s408 = scalar_select %p407, %s27, 2
          %p409 = scmp.lt.s32.totalorder %s406, 3
          %s410 = scalar_select %p409, %s406, 3
          %p411 = scmp.lt.s32.totalorder %s29, 0
          %s412 = scalar_select %p411, %s29, 0
          %s413 = sadd.s32 %s412, %s410
          %s414 = smul.addr %s408, 4
          %s415 = sadd.s32 %s413, %s414
          %s416 = smul.addr %s415, 8
          %s417 = scalar_lea.vmem %s2, %s416
        $region56: #{linformer_attention.4} parent=51 // pred_fallthru
          _
      $region52: #{linformer_attention.4} parent=5 // pred_fallthru
        _
    $region6: #{linformer_attention.4} parent=1 // loop_footer
      %s16 = sadd.s32 1, %s12
    $region7: #{linformer_attention.4} parent=1 // loop_footer_branch
      %11 = sbr.rel target = $region3
    $region8: #{linformer_attention.4} parent=1 // loop_exit
      _
    %418 = vsyncpa [#allocation4], 1
    %s419 = scalar_lea.sflag [#allocation4], 1
    %420 = vsyncpa %s419, 1
    %421 = vsyncpa [#allocation6], 1
    %s422 = scalar_lea.sflag [#allocation6], 1
    %423 = vsyncpa %s422, 1

// kernel: linformer_attention.5
$region0: #{linformer_attention.5}
  #allocation0 [shape = 'u32[]', space=smem, size = 0x4, offset = 0x4, fixed_abs, tag = 'smem constant byte address 0x4 - core index']
  #allocation1 [shape = 'u32[144,128]{1,0:T(1,128)}', space=vmem, size = 0x12000, scoped, tag = 'internal scratch']
  #allocation2 [shape = 'f32[8,32]{1,0:T(8,128)}', space=vmem, size = 0x1000, scoped, tag = 'scratch operand']
  %s0 = inlined_call_operand.vmem [shape: f32[3,2,16,32], index: 0, kind: input, shape index: {}]
  %s1 = inlined_call_operand.vmem [shape: f32[2,8,16], index: 1, kind: input, shape index: {}]
  %s2 = inlined_call_operand.vmem [shape: f32[2,2,8,32], index: 2, kind: output, shape index: {}]
  %s3 = sld [smem:[#allocation0]]
  $region49: #{linformer_attention.5} parent=0
    _
  %s5 = ssub.s32 1, %s3
  %s6 = scalar_select 0, %s5, %s3
  loop: start=0, step=1, limit=6
  $region2: #{linformer_attention.5} parent=0 // loop_pre_header
    _
  $region3: #{linformer_attention.5} parent=0 // loop_header
    %s8 = sphi 0, %s12
    %p9 = scmp.ge.s32.totalorder %s8, 6
    %s15 = sphi 0, %s34
    %s16 = sphi 0, %s30
    %s17 = sphi 0, %s26
    %s18 = sphi 0, %s15
    %s19 = sphi 0, %s16
    %s20 = sphi 0, %s17
    %s21 = sphi 0, %s18
    %s22 = sphi 0, %s19
    %s23 = sphi 0, %s20
    %s43 = sphi 0, %s45
    %s46 = sphi 0, %s43
    %s47 = sphi 0, %s46
    %s63 = sphi 0, %s47
    %s71 = sphi 0, %s73
    %s74 = sphi 0, %s71
    %s75 = sphi 0, %s74
    %s91 = sphi 0, %s75
    %s99 = sphi 0, %s101
    %s102 = sphi 0, %s99
    %s103 = sphi 0, %s102
    %s119 = sphi 0, %s103
  $region4: #{linformer_attention.5} parent=0 // loop_header_branch
    %11 = sbr.rel (%p9) target = $region8
  $region5: #{linformer_attention.5} parent=0 // loop_body
    %s13 = ssub.s32 %s8, 1
    %s14 = ssub.s32 %s8, 2
    %s24 = sadd.s32 1, %s17
    %p25 = scmp.ge.s32.totalorder %s24, 1
    %s26 = scalar_select %p25, 0, %s24
    %s27 = sadd.s32 1, %s16
    %s28 = scalar_select %p25, %s27, %s16
    %p29 = scmp.ge.s32.totalorder %s28, 2
    %s30 = scalar_select %p29, 0, %s28
    %s31 = sadd.s32 1, %s15
    %s32 = scalar_select %p29, %s31, %s15
    %p33 = scmp.ge.s32.totalorder %s32, 2
    %s34 = scalar_select %p33, 0, %s32
    %s35 = sadd.s32 %s15, 1
    %s36 = sadd.s32 %s34, 1
    %s37 = ssub.s32 %s35, %s36
    %s38 = ssub.s32 %s16, %s30
    %s39 = sor.u32 %s37, %s38
    %s40 = ssub.s32 %s17, %s26
    %s41 = sor.u32 %s39, %s40
    %p42 = scmp.eq.s32.totalorder %s41, 0
    %s44 = sadd.s32 %s43, 1
    %s45 = scalar_select %p42, %s43, %s44
    %p48 = pneg %p42
    %p49 = scmp.eq.s32.totalorder %s8, 3
    %p50 = por %p48, %p49
    %p51 = scmp.ne.s32.totalorder %s43, %s46
    %p52 = scmp.eq.s32.totalorder %s8, 0
    %p53 = por %p51, %p52
    %p54 = scmp.ne.s32.totalorder %s43, %s46
    %p55 = scmp.eq.s32.totalorder %s13, 3
    %p56 = por %p54, %p55
    %p57 = scmp.ne.s32.totalorder %s46, %s47
    %p58 = scmp.eq.s32.totalorder %s13, 0
    %p59 = por %p57, %p58
    %p60 = scmp.ne.s32.totalorder %s46, %s47
    %p61 = scmp.eq.s32.totalorder %s14, 3
    %p62 = por %p60, %p61
    %p64 = scmp.ne.s32.totalorder %s47, %s63
    %p65 = scmp.eq.s32.totalorder %s14, 0
    %p66 = por %p64, %p65
    %s67 = ssub.s32 %s15, %s34
    %s68 = ssub.s32 %s17, %s26
    %s69 = sor.u32 %s67, %s68
    %p70 = scmp.eq.s32.totalorder %s69, 0
    %s72 = sadd.s32 %s71, 1
    %s73 = scalar_select %p70, %s71, %s72
    %p76 = pneg %p70
    %p77 = scmp.eq.s32.totalorder %s8, 3
    %p78 = por %p76, %p77
    %p79 = scmp.ne.s32.totalorder %s71, %s74
    %p80 = scmp.eq.s32.totalorder %s8, 0
    %p81 = por %p79, %p80
    %p82 = scmp.ne.s32.totalorder %s71, %s74
    %p83 = scmp.eq.s32.totalorder %s13, 3
    %p84 = por %p82, %p83
    %p85 = scmp.ne.s32.totalorder %s74, %s75
    %p86 = scmp.eq.s32.totalorder %s13, 0
    %p87 = por %p85, %p86
    %p88 = scmp.ne.s32.totalorder %s74, %s75
    %p89 = scmp.eq.s32.totalorder %s14, 3
    %p90 = por %p88, %p89
    %p92 = scmp.ne.s32.totalorder %s75, %s91
    %p93 = scmp.eq.s32.totalorder %s14, 0
    %p94 = por %p92, %p93
    %s95 = ssub.s32 %s15, %s34
    %s96 = ssub.s32 %s16, %s30
    %s97 = sor.u32 %s95, %s96
    %p98 = scmp.eq.s32.totalorder %s97, 0
    %s100 = sadd.s32 %s99, 1
    %s101 = scalar_select %p98, %s99, %s100
    %p104 = pneg %p98
    %p105 = scmp.eq.s32.totalorder %s8, 3
    %p106 = por %p104, %p105
    %p107 = scmp.ne.s32.totalorder %s99, %s102
    %p108 = scmp.eq.s32.totalorder %s8, 0
    %p109 = por %p107, %p108
    %p110 = scmp.ne.s32.totalorder %s99, %s102
    %p111 = scmp.eq.s32.totalorder %s13, 3
    %p112 = por %p110, %p111
    %p113 = scmp.ne.s32.totalorder %s102, %s103
    %p114 = scmp.eq.s32.totalorder %s13, 0
    %p115 = por %p113, %p114
    %p116 = scmp.ne.s32.totalorder %s102, %s103
    %p117 = scmp.eq.s32.totalorder %s14, 3
    %p118 = por %p116, %p117
    %p120 = scmp.ne.s32.totalorder %s103, %s119
    %p121 = scmp.eq.s32.totalorder %s14, 0
    %p122 = por %p120, %p121
    %p123 = scmp.le.s32.totalorder 1, %s8
    %p124 = scmp.lt.s32.totalorder %s8, 5
    %p125 = pnand %p123, %p124
    %p126 = pneg %p125
    // Predicated region
    $region9: #{linformer_attention.5} parent=5 // pred_check
      _
    $region10: #{linformer_attention.5} parent=5 // pred_check_branch
      %128 = sbr.rel (%p125) target = $region12
    $region11: #{linformer_attention.5} parent=5 // pred_region
      %s129 = ssub.s32 %s8, 1
    $region12: #{linformer_attention.5} parent=5 // pred_fallthru
      _
    %p130 = scmp.lt.s32.totalorder %s8, 4
    // Predicated region
    $region13: #{linformer_attention.5} parent=5 // pred_check
      %p131 = pneg %p130
    $region14: #{linformer_attention.5} parent=5 // pred_check_branch
      %133 = sbr.rel (%p131) target = $region16
    $region15: #{linformer_attention.5} parent=5 // pred_region
      // Predicated region
      $region17: #{linformer_attention.5} parent=15 // pred_check
        %p134 = pneg %p53
      $region18: #{linformer_attention.5} parent=15 // pred_check_branch
        %136 = sbr.rel (%p134) target = $region20
      $region19: #{linformer_attention.5} parent=15 // pred_region
        %s137 = sadd.s32 %s15, 1
        %s138 = smul.u32 2, %s17
        %p139 = scmp.lt.s32.totalorder %s137, 2
        %s140 = scalar_select %p139, %s137, 2
        %p141 = scmp.lt.s32.totalorder %s16, 1
        %s142 = scalar_select %p141, %s16, 1
        %p143 = scmp.lt.s32.totalorder %s138, 1
        %s144 = scalar_select %p143, %s138, 1
        %s145 = smul.addr %s142, 2
        %s146 = sadd.s32 %s144, %s145
        %s147 = smul.addr %s140, 4
        %s148 = sadd.s32 %s146, %s147
        %s149 = smul.addr %s148, 8
        %s150 = scalar_lea.vmem %s0, %s149
        %s151 = sadd.s32 %s15, 1
        %s152 = smul.u32 2, %s17
      $region20: #{linformer_attention.5} parent=15 // pred_fallthru
        _
      // Predicated region
      $region21: #{linformer_attention.5} parent=15 // pred_check
        %p153 = pneg %p81
      $region22: #{linformer_attention.5} parent=15 // pred_check_branch
        %155 = sbr.rel (%p153) target = $region24
      $region23: #{linformer_attention.5} parent=15 // pred_region
        %p156 = scmp.lt.s32.totalorder %s15, 1
        %s157 = scalar_select %p156, %s15, 1
        %p158 = scmp.lt.s32.totalorder %s17, 0
        %s159 = scalar_select %p158, %s17, 0
        %s160 = sadd.s32 %s159, %s157
        %s161 = smul.addr %s160, 8
        %s162 = scalar_lea.vmem %s1, %s161
      $region24: #{linformer_attention.5} parent=15 // pred_fallthru
        _
    $region16: #{linformer_attention.5} parent=5 // pred_fallthru
      _
    %p163 = scmp.le.s32.totalorder 1, %s8
    %p164 = scmp.lt.s32.totalorder %s8, 5
    %p165 = pnand %p163, %p164
    %p166 = pneg %p165
    // Predicated region
    $region25: #{linformer_attention.5} parent=5 // pred_check
      _
    $region26: #{linformer_attention.5} parent=5 // pred_check_branch
      %168 = sbr.rel (%p165) target = $region28
    $region27: #{linformer_attention.5} parent=5 // pred_region
      %s169 = ssub.s32 %s8, 1
      %s170 = sadd.s32 %s18, 1
      %s171 = smul.u32 2, %s20
      %p172 = scmp.lt.s32.totalorder %s170, 2
      %s173 = scalar_select %p172, %s170, 2
      %p174 = scmp.lt.s32.totalorder %s19, 1
      %s175 = scalar_select %p174, %s19, 1
      %p176 = scmp.lt.s32.totalorder %s171, 1
      %s177 = scalar_select %p176, %s171, 1
      %s178 = smul.addr %s175, 2
      %s179 = sadd.s32 %s177, %s178
      %s180 = smul.addr %s173, 4
      %s181 = sadd.s32 %s179, %s180
      %s182 = smul.addr %s181, 8
      %s183 = scalar_lea.vmem %s0, %s182
      %p184 = pneg %p59
      %p185 = pneg %p56
      %p186 = scmp.lt.s32.totalorder %s18, 1
      %s187 = scalar_select %p186, %s18, 1
      %p188 = scmp.lt.s32.totalorder %s20, 0
      %s189 = scalar_select %p188, %s20, 0
      %s190 = sadd.s32 %s189, %s187
      %s191 = smul.addr %s190, 8
      %s192 = scalar_lea.vmem %s1, %s191
      %p193 = pneg %p87
      %p194 = pneg %p84
      %p195 = pneg %p115
      %p196 = pneg %p112
      %p197 = scmp.lt.s32.totalorder %s18, 1
      %s198 = scalar_select %p197, %s18, 1
      %p199 = scmp.lt.s32.totalorder %s19, 1
      %s200 = scalar_select %p199, %s19, 1
      %s201 = smul.addr %s198, 2
      %s202 = sadd.s32 %s200, %s201
      %s203 = smul.addr %s202, 8
      %s204 = scalar_lea.vmem %s2, %s203
      %s205 = sadd.s32 %s18, 1
      %s206 = smul.u32 2, %s20
      %p207 = scmp.lt.s32.totalorder %s205, 2
      %s208 = scalar_select %p207, %s205, 2
      %p209 = scmp.lt.s32.totalorder %s19, 1
      %s210 = scalar_select %p209, %s19, 1
      %p211 = scmp.lt.s32.totalorder %s206, 1
      %s212 = scalar_select %p211, %s206, 1
      %s213 = smul.addr %s210, 2
      %s214 = sadd.s32 %s212, %s213
      %s215 = smul.addr %s208, 4
      %s216 = sadd.s32 %s214, %s215
      %s217 = smul.addr %s216, 8
      %s218 = scalar_lea.vmem %s0, %s217
      %s219 = sadd.s32 %s18, 1
      %s220 = smul.u32 2, %s20
      %p221 = scmp.lt.s32.totalorder %s18, 1
      %s222 = scalar_select %p221, %s18, 1
      %p223 = scmp.lt.s32.totalorder %s20, 0
      %s224 = scalar_select %p223, %s20, 0
      %s225 = sadd.s32 %s224, %s222
      %s226 = smul.addr %s225, 8
      %s227 = scalar_lea.vmem %s1, %s226
      %p228 = scmp.lt.s32.totalorder %s18, 1
      %s229 = scalar_select %p228, %s18, 1
      %p230 = scmp.lt.s32.totalorder %s19, 1
      %s231 = scalar_select %p230, %s19, 1
      %s232 = smul.addr %s229, 2
      %s233 = sadd.s32 %s231, %s232
      %s234 = smul.addr %s233, 8
      %s235 = scalar_lea.vmem %s2, %s234
      %p236 = scmp.eq.s32.totalorder %s20, 0
      // Predicated region
      $region29: #{linformer_attention.5} parent=27 // pred_check
        %p237 = pneg %p236
      $region30: #{linformer_attention.5} parent=27 // pred_check_branch
        %239 = sbr.rel (%p237) target = $region32
      $region31: #{linformer_attention.5} parent=27 // pred_region
        %vm240 = vcmask 261120
        %241 = vst.msk [vmem:[#allocation2] sm:$0xff] %vm240, 0.0
      $region32: #{linformer_attention.5} parent=27 // pred_fallthru
        _
      %v242 = vld [vmem:[#allocation2] sm:$0xff]
      %v243 = vld [vmem:[%s227] sm:$0xff]
      %v244 = vld [vmem:[%s218] sm:$0xff]
      %v245 = vld [vmem:[%s218 + $0x8] sm:$0xff]
      %vm246 = vcmask 130048
      %v248 = vsel %vm246, %v243, 0
      %250 = vmatprep.subr.mxu0 0.0
      %251 = vmatpush1.msra.mxu0 %v244
      %252 = vmatprep.subr.mxu0 0.0
      %253 = vmatpush1.msra.mxu0 %v245
      %254 = vmatprep.subr.mxu0 0.0
      %255 = vmatpush1.msra.mxu0 0.0
      %256 = vmatprep.subr.mxu0 0.0
      %257 = vmatpush1.msra.mxu0 0.0
      %258 = vmatprep.subr.mxu0 0.0
      %259 = vmatpush1.msra.mxu0 0.0
      %260 = vmatprep.subr.mxu0 0.0
      %261 = vmatpush1.msra.mxu0 0.0
      %262 = vmatprep.subr.mxu0 0.0
      %263 = vmatpush1.msra.mxu0 0.0
      %264 = vmatprep.subr.mxu0 0.0
      %265 = vmatpush1.msra.mxu0 0.0
      %266 = vmatprep.subr.mxu0 0.0
      %267 = vmatpush1.msra.mxu0 0.0
      %268 = vmatprep.subr.mxu0 0.0
      %269 = vmatpush1.msra.mxu0 0.0
      %270 = vmatprep.subr.mxu0 0.0
      %271 = vmatpush1.msra.mxu0 0.0
      %272 = vmatprep.subr.mxu0 0.0
      %273 = vmatpush1.msra.mxu0 0.0
      %274 = vmatprep.subr.mxu0 0.0
      %275 = vmatpush1.msra.mxu0 0.0
      %276 = vmatprep.subr.mxu0 0.0
      %277 = vmatpush1.msra.mxu0 0.0
      %278 = vmatprep.subr.mxu0 0.0
      %279 = vmatpush1.msra.mxu0 0.0
      %280 = vmatprep.subr.mxu0 0.0
      %281 = vmatpush1.msra.mxu0 0.0
      %282 = vmatprep.subr.mxu0 0.0
      %283 = vmatpush1.msra.mxu0 0.0
      %284 = vmatprep.subr.mxu0 0.0
      %285 = vmatpush1.msra.mxu0 0.0
      %286 = vmatprep.subr.mxu0 0.0
      %287 = vmatpush1.msra.mxu0 0.0
      %288 = vmatprep.subr.mxu0 0.0
      %289 = vmatpush1.msra.mxu0 0.0
      %290 = vmatprep.subr.mxu0 0.0
      %291 = vmatpush1.msra.mxu0 0.0
      %292 = vmatprep.subr.mxu0 0.0
      %293 = vmatpush1.msra.mxu0 0.0
      %294 = vmatprep.subr.mxu0 0.0
      %295 = vmatpush1.msra.mxu0 0.0
      %296 = vmatprep.subr.mxu0 0.0
      %297 = vmatpush1.msra.mxu0 0.0
      %298 = vmatprep.subr.mxu0 0.0
      %299 = vmatpush1.msra.mxu0 0.0
      %300 = vmatprep.subr.mxu0 0.0
      %301 = vmatpush1.msra.mxu0 0.0
      %302 = vmatprep.subr.mxu0 0.0
      %303 = vmatpush1.msra.mxu0 0.0
      %304 = vmatprep.subr.mxu0 0.0
      %305 = vmatpush1.msra.mxu0 0.0
      %306 = vmatprep.subr.mxu0 0.0
      %307 = vmatpush1.msra.mxu0 0.0
      %308 = vmatprep.subr.mxu0 0.0
      %309 = vmatpush1.msra.mxu0 0.0
      %310 = vmatprep.subr.mxu0 0.0
      %311 = vmatpush1.msra.mxu0 0.0
      %312 = vmatprep.subr.mxu0 0.0
      %313 = vmatpush1.msra.mxu0 0.0
      %314 = vmatprep.mubr.f32.mxu0 0.0
      %315 = vmatmul.mubr.f32.gmra.mrb[0].mxu0 %v248
      %v316 = vpop.f32.mrb[0].mxu0
      %v317 = vadd.f32 0.0, %v316
      %v318 = vpop.f32.mrb[0].mxu0
      %319 = vdwg.mxu0
      %v320 = vadd.f32 %v242, %v317
      %vm321 = vcmask 261120
      %322 = vst.msk [vmem:[#allocation2] sm:$0xff] %vm321, %v320
      // Predicated region
      $region33: #{linformer_attention.5} parent=27 // pred_check
        %p323 = pneg %p236
      $region34: #{linformer_attention.5} parent=27 // pred_check_branch
        %325 = sbr.rel (%p323) target = $region36
      $region35: #{linformer_attention.5} parent=27 // pred_region
        %v326 = vld [vmem:[#allocation2] sm:$0xff]
        %327 = vst.msk [vmem:[%s235] sm:$0xff] %vm321, %v326
      $region36: #{linformer_attention.5} parent=27 // pred_fallthru
        _
      %p328 = scmp.lt.s32.totalorder %s18, 1
      %s329 = scalar_select %p328, %s18, 1
      %p330 = scmp.lt.s32.totalorder %s19, 1
      %s331 = scalar_select %p330, %s19, 1
      %s332 = smul.addr %s329, 2
      %s333 = sadd.s32 %s331, %s332
      %s334 = smul.addr %s333, 8
      %s335 = scalar_lea.vmem %s2, %s334
      // Predicated region
      $region37: #{linformer_attention.5} parent=27 // pred_check
        %p336 = pneg %p112
      $region38: #{linformer_attention.5} parent=27 // pred_check_branch
        %338 = sbr.rel (%p336) target = $region40
      $region39: #{linformer_attention.5} parent=27 // pred_region
        _
      $region40: #{linformer_attention.5} parent=27 // pred_fallthru
        _
    $region28: #{linformer_attention.5} parent=5 // pred_fallthru
      _
    %p339 = scmp.le.s32.totalorder 2, %s8
    // Predicated region
    $region41: #{linformer_attention.5} parent=5 // pred_check
      %p340 = pneg %p339
    $region42: #{linformer_attention.5} parent=5 // pred_check_branch
      %342 = sbr.rel (%p340) target = $region44
    $region43: #{linformer_attention.5} parent=5 // pred_region
      %s343 = ssub.s32 %s8, 2
      // Predicated region
      $region45: #{linformer_attention.5} parent=43 // pred_check
        %p344 = pneg %p118
      $region46: #{linformer_attention.5} parent=43 // pred_check_branch
        %346 = sbr.rel (%p344) target = $region48
      $region47: #{linformer_attention.5} parent=43 // pred_region
        %p347 = scmp.lt.s32.totalorder %s21, 1
        %s348 = scalar_select %p347, %s21, 1
        %p349 = scmp.lt.s32.totalorder %s22, 1
        %s350 = scalar_select %p349, %s22, 1
        %s351 = smul.addr %s348, 2
        %s352 = sadd.s32 %s350, %s351
        %s353 = smul.addr %s352, 8
        %s354 = scalar_lea.vmem %s2, %s353
      $region48: #{linformer_attention.5} parent=43 // pred_fallthru
        _
    $region44: #{linformer_attention.5} parent=5 // pred_fallthru
      _
  $region6: #{linformer_attention.5} parent=0 // loop_footer
    %s12 = sadd.s32 1, %s8
  $region7: #{linformer_attention.5} parent=0 // loop_footer_branch
    %7 = sbr.rel target = $region3
  $region8: #{linformer_attention.5} parent=0 // loop_exit
    _

// kernel: linformer_attention.7
$region0: #{linformer_attention.7}
  #allocation0 [shape = 'u32[]', space=smem, size = 0x4, offset = 0x4, fixed_abs, tag = 'smem constant byte address 0x4 - core index']
  #allocation1 [shape = 'u32[144,128]{1,0:T(1,128)}', space=vmem, size = 0x12000, scoped, tag = 'internal scratch']
  #allocation2 [shape = 'f32[32,32]{1,0:T(8,128)}', space=vmem, size = 0x4000, scoped, tag = 'scratch operand']
  %s0 = inlined_call_operand.vmem [shape: f32[32,32], index: 0, kind: input, shape index: {}]
  %s1 = inlined_call_operand.vmem [shape: f32[1,32,32], index: 1, kind: input, shape index: {}]
  %s2 = inlined_call_operand.hbm [shape: f32[1,32,32], index: 2, kind: output, shape index: {}]
  %s3 = sld [smem:[#allocation0]]
  $region26: #{linformer_attention.7} parent=0
    _
  %s5 = ssub.s32 1, %s3
  %s6 = scalar_select 0, %s5, %s3
  $region1: #{linformer_attention.7} parent=0
    #allocation3 [shape = 'u8[16384]{0}', space=vmem, size = 0x4000, scoped, tag = 'output window, operand 0, single buffered']
    #allocation4 [shape = 's32[1]{0}', space=sflag, size = 0x4, scoped, tag = 'scoped memory for linformer_attention.7']
    %7 = vsyncpa [#allocation4], 0
    // Predicated region
    $region2: #{linformer_attention.7} parent=1 // pred_check
      _
    $region3: #{linformer_attention.7} parent=1 // pred_check_branch
      %9 = sbr.rel (0) target = $region5
    $region4: #{linformer_attention.7} parent=1 // pred_region
      _
    $region5: #{linformer_attention.7} parent=1 // pred_fallthru
      _
    // Predicated region
    $region6: #{linformer_attention.7} parent=1 // pred_check
      _
    $region7: #{linformer_attention.7} parent=1 // pred_check_branch
      %11 = sbr.rel (0) target = $region9
    $region8: #{linformer_attention.7} parent=1 // pred_region
      _
    $region9: #{linformer_attention.7} parent=1 // pred_fallthru
      _
    %p12 = scmp.eq.s32.totalorder 0, 0
    // Predicated region
    $region10: #{linformer_attention.7} parent=1 // pred_check
      %p13 = pneg %p12
    $region11: #{linformer_attention.7} parent=1 // pred_check_branch
      %15 = sbr.rel (%p13) target = $region13
    $region12: #{linformer_attention.7} parent=1 // pred_region
      %vm16 = vcmask 261120
      %17 = vst.msk [vmem:[#allocation2] sm:$0xff] %vm16, 0.0
      %18 = vst.msk [vmem:[#allocation2 + $0x8] sm:$0xff] %vm16, 0.0
      %19 = vst.msk [vmem:[#allocation2 + $0x10] sm:$0xff] %vm16, 0.0
      %20 = vst.msk [vmem:[#allocation2 + $0x18] sm:$0xff] %vm16, 0.0
    $region13: #{linformer_attention.7} parent=1 // pred_fallthru
      _
    %v21 = vld [vmem:[#allocation2] sm:$0xff]
    %v22 = vld [vmem:[#allocation2 + $0x8] sm:$0xff]
    %v23 = vld [vmem:[#allocation2 + $0x10] sm:$0xff]
    %v24 = vld [vmem:[#allocation2 + $0x18] sm:$0xff]
    %v25 = vld [vmem:[%s0] sm:$0xff]
    %v26 = vld [vmem:[%s0 + $0x8] sm:$0xff]
    %v27 = vld [vmem:[%s0 + $0x10] sm:$0xff]
    %v28 = vld [vmem:[%s0 + $0x18] sm:$0xff]
    %v29 = vld [vmem:[%s1] sm:$0xff]
    %v30 = vld [vmem:[%s1 + $0x8] sm:$0xff]
    %v31 = vld [vmem:[%s1 + $0x10] sm:$0xff]
    %v32 = vld [vmem:[%s1 + $0x18] sm:$0xff]
    %vm33 = vcmask 261120
    %v35 = vsel %vm33, %v25, 0
    %v38 = vsel %vm33, %v26, 0
    %v41 = vsel %vm33, %v27, 0
    %v44 = vsel %vm33, %v28, 0
    %46 = vmatprep.subr.mxu0 0.0
    %47 = vmatpush1.msra.mxu0 %v29
    %48 = vmatprep.subr.mxu0 0.0
    %49 = vmatpush1.msra.mxu0 %v30
    %50 = vmatprep.subr.mxu0 0.0
    %51 = vmatpush1.msra.mxu0 %v31
    %52 = vmatprep.subr.mxu0 0.0
    %53 = vmatpush1.msra.mxu0 %v32
    %54 = vmatprep.subr.mxu0 0.0
    %55 = vmatpush1.msra.mxu0 0.0
    %56 = vmatprep.subr.mxu0 0.0
    %57 = vmatpush1.msra.mxu0 0.0
    %58 = vmatprep.subr.mxu0 0.0
    %59 = vmatpush1.msra.mxu0 0.0
    %60 = vmatprep.subr.mxu0 0.0
    %61 = vmatpush1.msra.mxu0 0.0
    %62 = vmatprep.subr.mxu0 0.0
    %63 = vmatpush1.msra.mxu0 0.0
    %64 = vmatprep.subr.mxu0 0.0
    %65 = vmatpush1.msra.mxu0 0.0
    %66 = vmatprep.subr.mxu0 0.0
    %67 = vmatpush1.msra.mxu0 0.0
    %68 = vmatprep.subr.mxu0 0.0
    %69 = vmatpush1.msra.mxu0 0.0
    %70 = vmatprep.subr.mxu0 0.0
    %71 = vmatpush1.msra.mxu0 0.0
    %72 = vmatprep.subr.mxu0 0.0
    %73 = vmatpush1.msra.mxu0 0.0
    %74 = vmatprep.subr.mxu0 0.0
    %75 = vmatpush1.msra.mxu0 0.0
    %76 = vmatprep.subr.mxu0 0.0
    %77 = vmatpush1.msra.mxu0 0.0
    %78 = vmatprep.subr.mxu0 0.0
    %79 = vmatpush1.msra.mxu0 0.0
    %80 = vmatprep.subr.mxu0 0.0
    %81 = vmatpush1.msra.mxu0 0.0
    %82 = vmatprep.subr.mxu0 0.0
    %83 = vmatpush1.msra.mxu0 0.0
    %84 = vmatprep.subr.mxu0 0.0
    %85 = vmatpush1.msra.mxu0 0.0
    %86 = vmatprep.subr.mxu0 0.0
    %87 = vmatpush1.msra.mxu0 0.0
    %88 = vmatprep.subr.mxu0 0.0
    %89 = vmatpush1.msra.mxu0 0.0
    %90 = vmatprep.subr.mxu0 0.0
    %91 = vmatpush1.msra.mxu0 0.0
    %92 = vmatprep.subr.mxu0 0.0
    %93 = vmatpush1.msra.mxu0 0.0
    %94 = vmatprep.subr.mxu0 0.0
    %95 = vmatpush1.msra.mxu0 0.0
    %96 = vmatprep.subr.mxu0 0.0
    %97 = vmatpush1.msra.mxu0 0.0
    %98 = vmatprep.subr.mxu0 0.0
    %99 = vmatpush1.msra.mxu0 0.0
    %100 = vmatprep.subr.mxu0 0.0
    %101 = vmatpush1.msra.mxu0 0.0
    %102 = vmatprep.subr.mxu0 0.0
    %103 = vmatpush1.msra.mxu0 0.0
    %104 = vmatprep.subr.mxu0 0.0
    %105 = vmatpush1.msra.mxu0 0.0
    %106 = vmatprep.subr.mxu0 0.0
    %107 = vmatpush1.msra.mxu0 0.0
    %108 = vmatprep.subr.mxu0 0.0
    %109 = vmatpush1.msra.mxu0 0.0
    %110 = vmatprep.mubr.f32.mxu0 0.0
    %111 = vmatmul.mubr.f32.gmra.mrb[0].mxu0 %v35
    %v112 = vpop.f32.mrb[0].mxu0
    %v113 = vadd.f32 0.0, %v112
    %v114 = vpop.f32.mrb[0].mxu0
    %115 = vmatprep.mubr.f32.mxu0 0.0
    %116 = vmatmul.mubr.f32.gmra.mrb[0].mxu0 %v38
    %v117 = vpop.f32.mrb[0].mxu0
    %v118 = vadd.f32 0.0, %v117
    %v119 = vpop.f32.mrb[0].mxu0
    %120 = vmatprep.mubr.f32.mxu0 0.0
    %121 = vmatmul.mubr.f32.gmra.mrb[0].mxu0 %v41
    %v122 = vpop.f32.mrb[0].mxu0
    %v123 = vadd.f32 0.0, %v122
    %v124 = vpop.f32.mrb[0].mxu0
    %125 = vmatprep.mubr.f32.mxu0 0.0
    %126 = vmatmul.mubr.f32.gmra.mrb[0].mxu0 %v44
    %v127 = vpop.f32.mrb[0].mxu0
    %v128 = vadd.f32 0.0, %v127
    %v129 = vpop.f32.mrb[0].mxu0
    %130 = vdwg.mxu0
    %v131 = vadd.f32 %v21, %v113
    %v132 = vadd.f32 %v22, %v118
    %v133 = vadd.f32 %v23, %v123
    %v134 = vadd.f32 %v24, %v128
    %135 = vst.msk [vmem:[#allocation2] sm:$0xff] %vm33, %v131
    %136 = vst.msk [vmem:[#allocation2 + $0x8] sm:$0xff] %vm33, %v132
    %137 = vst.msk [vmem:[#allocation2 + $0x10] sm:$0xff] %vm33, %v133
    %138 = vst.msk [vmem:[#allocation2 + $0x18] sm:$0xff] %vm33, %v134
    // Predicated region
    $region14: #{linformer_attention.7} parent=1 // pred_check
      %p139 = pneg %p12
    $region15: #{linformer_attention.7} parent=1 // pred_check_branch
      %141 = sbr.rel (%p139) target = $region17
    $region16: #{linformer_attention.7} parent=1 // pred_region
      %v142 = vld [vmem:[#allocation2] sm:$0xff]
      %v143 = vld [vmem:[#allocation2 + $0x8] sm:$0xff]
      %v144 = vld [vmem:[#allocation2 + $0x10] sm:$0xff]
      %v145 = vld [vmem:[#allocation2 + $0x18] sm:$0xff]
      %146 = vst.msk [vmem:[#allocation3] sm:$0xff] %vm33, %v142
      %147 = vst.msk [vmem:[#allocation3 + $0x8] sm:$0xff] %vm33, %v143
      %148 = vst.msk [vmem:[#allocation3 + $0x10] sm:$0xff] %vm33, %v144
      %149 = vst.msk [vmem:[#allocation3 + $0x18] sm:$0xff] %vm33, %v145
    $region17: #{linformer_attention.7} parent=1 // pred_fallthru
      _
    // Predicated region
    $region18: #{linformer_attention.7} parent=1 // pred_check
      _
    $region19: #{linformer_attention.7} parent=1 // pred_check_branch
      %151 = sbr.rel (0) target = $region21
    $region20: #{linformer_attention.7} parent=1 // pred_region
      %s153 = ssub.s32 512, 512
      %154 = vsyncadd [#allocation4], %s153
      %s155 = sshll.u32 [#allocation3], 4
      %s156 = int_to_ptr.vmem [resolvable:$true] %s155
      %161 = dma.vmem_to_hbm [thread:$0]  %s156, 512, %s2, [#allocation4], 128, 128, 8
    $region21: #{linformer_attention.7} parent=1 // pred_fallthru
      _
    // Predicated region
    $region22: #{linformer_attention.7} parent=1 // pred_check
      _
    $region23: #{linformer_attention.7} parent=1 // pred_check_branch
      %163 = sbr.rel (0) target = $region25
    $region24: #{linformer_attention.7} parent=1 // pred_region
      %164 = dma.done [#allocation4], 512
    $region25: #{linformer_attention.7} parent=1 // pred_fallthru
      _
    %165 = vsyncpa [#allocation4], 1

// kernel: linformer_attention.6
$region0: #{linformer_attention.6}
  #allocation0 [shape = 'u32[]', space=smem, size = 0x4, offset = 0x4, fixed_abs, tag = 'smem constant byte address 0x4 - core index']
  #allocation1 [shape = 'u32[144,128]{1,0:T(1,128)}', space=vmem, size = 0x12000, scoped, tag = 'internal scratch']
  %s0 = inlined_call_operand.vmem [shape: f32[3,2,16,32], index: 0, kind: input, shape index: {}]
  %s1 = inlined_call_operand.vmem [shape: f32[2,2,8,32], index: 1, kind: input, shape index: {}, may-alias: {1,2}]
  %s2 = inlined_call_operand.vmem [shape: f32[2,2,8,32], index: 2, kind: input, shape index: {}, may-alias: {1,2}]
  %s3 = inlined_call_operand.vmem [shape: f32[2,16,32], index: 3, kind: output, shape index: {}]
  %s4 = sld [smem:[#allocation0]]
  $region45: #{linformer_attention.6} parent=0
    _
  %s6 = ssub.s32 1, %s4
  %s7 = scalar_select 0, %s6, %s4
  loop: start=0, step=1, limit=4
  $region2: #{linformer_attention.6} parent=0 // loop_pre_header
    _
  $region3: #{linformer_attention.6} parent=0 // loop_header
    %s9 = sphi 0, %s13
    %p10 = scmp.ge.s32.totalorder %s9, 4
    %s16 = sphi 0, %s28
    %s17 = sphi 0, %s24
    %s18 = sphi 0, %s16
    %s19 = sphi 0, %s17
    %s20 = sphi 0, %s18
    %s21 = sphi 0, %s19
    %s33 = sphi 0, %s35
    %s36 = sphi 0, %s33
    %s37 = sphi 0, %s36
    %s53 = sphi 0, %s37
    %s59 = sphi 0, %s61
    %s62 = sphi 0, %s59
    %s63 = sphi 0, %s62
    %s79 = sphi 0, %s63
    %s85 = sphi 0, %s87
    %s88 = sphi 0, %s85
    %s89 = sphi 0, %s88
    %s105 = sphi 0, %s89
    %s113 = sphi 0, %s115
    %s116 = sphi 0, %s113
    %s117 = sphi 0, %s116
    %s133 = sphi 0, %s117
  $region4: #{linformer_attention.6} parent=0 // loop_header_branch
    %12 = sbr.rel (%p10) target = $region8
  $region5: #{linformer_attention.6} parent=0 // loop_body
    %s14 = ssub.s32 %s9, 1
    %s15 = ssub.s32 %s9, 2
    %s22 = sadd.s32 1, %s17
    %p23 = scmp.ge.s32.totalorder %s22, 1
    %s24 = scalar_select %p23, 0, %s22
    %s25 = sadd.s32 1, %s16
    %s26 = scalar_select %p23, %s25, %s16
    %p27 = scmp.ge.s32.totalorder %s26, 2
    %s28 = scalar_select %p27, 0, %s26
    %s29 = ssub.s32 %s16, %s28
    %s30 = ssub.s32 %s17, %s24
    %s31 = sor.u32 %s29, %s30
    %p32 = scmp.eq.s32.totalorder %s31, 0
    %s34 = sadd.s32 %s33, 1
    %s35 = scalar_select %p32, %s33, %s34
    %p38 = pneg %p32
    %p39 = scmp.eq.s32.totalorder %s9, 1
    %p40 = por %p38, %p39
    %p41 = scmp.ne.s32.totalorder %s33, %s36
    %p42 = scmp.eq.s32.totalorder %s9, 0
    %p43 = por %p41, %p42
    %p44 = scmp.ne.s32.totalorder %s33, %s36
    %p45 = scmp.eq.s32.totalorder %s14, 1
    %p46 = por %p44, %p45
    %p47 = scmp.ne.s32.totalorder %s36, %s37
    %p48 = scmp.eq.s32.totalorder %s14, 0
    %p49 = por %p47, %p48
    %p50 = scmp.ne.s32.totalorder %s36, %s37
    %p51 = scmp.eq.s32.totalorder %s15, 1
    %p52 = por %p50, %p51
    %p54 = scmp.ne.s32.totalorder %s37, %s53
    %p55 = scmp.eq.s32.totalorder %s15, 0
    %p56 = por %p54, %p55
    %s57 = ssub.s32 %s16, %s28
    %p58 = scmp.eq.s32.totalorder %s57, 0
    %s60 = sadd.s32 %s59, 1
    %s61 = scalar_select %p58, %s59, %s60
    %p64 = pneg %p58
    %p65 = scmp.eq.s32.totalorder %s9, 1
    %p66 = por %p64, %p65
    %p67 = scmp.ne.s32.totalorder %s59, %s62
    %p68 = scmp.eq.s32.totalorder %s9, 0
    %p69 = por %p67, %p68
    %p70 = scmp.ne.s32.totalorder %s59, %s62
    %p71 = scmp.eq.s32.totalorder %s14, 1
    %p72 = por %p70, %p71
    %p73 = scmp.ne.s32.totalorder %s62, %s63
    %p74 = scmp.eq.s32.totalorder %s14, 0
    %p75 = por %p73, %p74
    %p76 = scmp.ne.s32.totalorder %s62, %s63
    %p77 = scmp.eq.s32.totalorder %s15, 1
    %p78 = por %p76, %p77
    %p80 = scmp.ne.s32.totalorder %s63, %s79
    %p81 = scmp.eq.s32.totalorder %s15, 0
    %p82 = por %p80, %p81
    %s83 = ssub.s32 %s16, %s28
    %p84 = scmp.eq.s32.totalorder %s83, 0
    %s86 = sadd.s32 %s85, 1
    %s87 = scalar_select %p84, %s85, %s86
    %p90 = pneg %p84
    %p91 = scmp.eq.s32.totalorder %s9, 1
    %p92 = por %p90, %p91
    %p93 = scmp.ne.s32.totalorder %s85, %s88
    %p94 = scmp.eq.s32.totalorder %s9, 0
    %p95 = por %p93, %p94
    %p96 = scmp.ne.s32.totalorder %s85, %s88
    %p97 = scmp.eq.s32.totalorder %s14, 1
    %p98 = por %p96, %p97
    %p99 = scmp.ne.s32.totalorder %s88, %s89
    %p100 = scmp.eq.s32.totalorder %s14, 0
    %p101 = por %p99, %p100
    %p102 = scmp.ne.s32.totalorder %s88, %s89
    %p103 = scmp.eq.s32.totalorder %s15, 1
    %p104 = por %p102, %p103
    %p106 = scmp.ne.s32.totalorder %s89, %s105
    %p107 = scmp.eq.s32.totalorder %s15, 0
    %p108 = por %p106, %p107
    %s109 = ssub.s32 %s16, %s28
    %s110 = ssub.s32 %s17, %s24
    %s111 = sor.u32 %s109, %s110
    %p112 = scmp.eq.s32.totalorder %s111, 0
    %s114 = sadd.s32 %s113, 1
    %s115 = scalar_select %p112, %s113, %s114
    %p118 = pneg %p112
    %p119 = scmp.eq.s32.totalorder %s9, 1
    %p120 = por %p118, %p119
    %p121 = scmp.ne.s32.totalorder %s113, %s116
    %p122 = scmp.eq.s32.totalorder %s9, 0
    %p123 = por %p121, %p122
    %p124 = scmp.ne.s32.totalorder %s113, %s116
    %p125 = scmp.eq.s32.totalorder %s14, 1
    %p126 = por %p124, %p125
    %p127 = scmp.ne.s32.totalorder %s116, %s117
    %p128 = scmp.eq.s32.totalorder %s14, 0
    %p129 = por %p127, %p128
    %p130 = scmp.ne.s32.totalorder %s116, %s117
    %p131 = scmp.eq.s32.totalorder %s15, 1
    %p132 = por %p130, %p131
    %p134 = scmp.ne.s32.totalorder %s117, %s133
    %p135 = scmp.eq.s32.totalorder %s15, 0
    %p136 = por %p134, %p135
    %p137 = scmp.le.s32.totalorder 1, %s9
    %p138 = scmp.lt.s32.totalorder %s9, 3
    %p139 = pnand %p137, %p138
    %p140 = pneg %p139
    // Predicated region
    $region9: #{linformer_attention.6} parent=5 // pred_check
      _
    $region10: #{linformer_attention.6} parent=5 // pred_check_branch
      %142 = sbr.rel (%p139) target = $region12
    $region11: #{linformer_attention.6} parent=5 // pred_region
      %s143 = ssub.s32 %s9, 1
    $region12: #{linformer_attention.6} parent=5 // pred_fallthru
      _
    %p144 = scmp.lt.s32.totalorder %s9, 2
    // Predicated region
    $region13: #{linformer_attention.6} parent=5 // pred_check
      %p145 = pneg %p144
    $region14: #{linformer_attention.6} parent=5 // pred_check_branch
      %147 = sbr.rel (%p145) target = $region16
    $region15: #{linformer_attention.6} parent=5 // pred_region
      // Predicated region
      $region17: #{linformer_attention.6} parent=15 // pred_check
        %p148 = pneg %p43
      $region18: #{linformer_attention.6} parent=15 // pred_check_branch
        %150 = sbr.rel (%p148) target = $region20
      $region19: #{linformer_attention.6} parent=15 // pred_region
        %s151 = smul.u32 2, %s17
        %p152 = scmp.lt.s32.totalorder %s16, 1
        %s153 = scalar_select %p152, %s16, 1
        %p154 = scmp.lt.s32.totalorder %s151, 1
        %s155 = scalar_select %p154, %s151, 1
        %s156 = smul.addr %s153, 2
        %s157 = sadd.s32 %s155, %s156
        %s158 = smul.addr %s157, 8
        %s159 = scalar_lea.vmem %s0, %s158
        %s160 = smul.u32 2, %s17
      $region20: #{linformer_attention.6} parent=15 // pred_fallthru
        _
      // Predicated region
      $region21: #{linformer_attention.6} parent=15 // pred_check
        %p161 = pneg %p69
      $region22: #{linformer_attention.6} parent=15 // pred_check_branch
        %163 = sbr.rel (%p161) target = $region24
      $region23: #{linformer_attention.6} parent=15 // pred_region
        %p164 = scmp.lt.s32.totalorder %s16, 1
        %s165 = scalar_select %p164, %s16, 1
        %s166 = smul.addr %s165, 8
        %s167 = scalar_lea.vmem %s1, %s166
      $region24: #{linformer_attention.6} parent=15 // pred_fallthru
        _
      // Predicated region
      $region25: #{linformer_attention.6} parent=15 // pred_check
        %p168 = pneg %p95
      $region26: #{linformer_attention.6} parent=15 // pred_check_branch
        %170 = sbr.rel (%p168) target = $region28
      $region27: #{linformer_attention.6} parent=15 // pred_region
        %p171 = scmp.lt.s32.totalorder %s16, 1
        %s172 = scalar_select %p171, %s16, 1
        %s173 = sadd.s32 %s172, 2
        %s174 = smul.addr %s173, 8
        %s175 = scalar_lea.vmem %s2, %s174
      $region28: #{linformer_attention.6} parent=15 // pred_fallthru
        _
    $region16: #{linformer_attention.6} parent=5 // pred_fallthru
      _
    %p176 = scmp.le.s32.totalorder 1, %s9
    %p177 = scmp.lt.s32.totalorder %s9, 3
    %p178 = pnand %p176, %p177
    %p179 = pneg %p178
    // Predicated region
    $region29: #{linformer_attention.6} parent=5 // pred_check
      _
    $region30: #{linformer_attention.6} parent=5 // pred_check_branch
      %181 = sbr.rel (%p178) target = $region32
    $region31: #{linformer_attention.6} parent=5 // pred_region
      %s182 = ssub.s32 %s9, 1
      %s183 = smul.u32 2, %s19
      %p184 = scmp.lt.s32.totalorder %s18, 1
      %s185 = scalar_select %p184, %s18, 1
      %p186 = scmp.lt.s32.totalorder %s183, 1
      %s187 = scalar_select %p186, %s183, 1
      %s188 = smul.addr %s185, 2
      %s189 = sadd.s32 %s187, %s188
      %s190 = smul.addr %s189, 8
      %s191 = scalar_lea.vmem %s0, %s190
      %p192 = pneg %p49
      %p193 = pneg %p46
      %p194 = scmp.lt.s32.totalorder %s18, 1
      %s195 = scalar_select %p194, %s18, 1
      %s196 = smul.addr %s195, 8
      %s197 = scalar_lea.vmem %s1, %s196
      %p198 = pneg %p75
      %p199 = pneg %p72
      %p200 = scmp.lt.s32.totalorder %s18, 1
      %s201 = scalar_select %p200, %s18, 1
      %s202 = sadd.s32 %s201, 2
      %s203 = smul.addr %s202, 8
      %s204 = scalar_lea.vmem %s2, %s203
      %p205 = pneg %p101
      %p206 = pneg %p98
      %p207 = pneg %p129
      %p208 = pneg %p126
      %s209 = smul.u32 2, %s19
      %p210 = scmp.lt.s32.totalorder %s18, 1
      %s211 = scalar_select %p210, %s18, 1
      %p212 = scmp.lt.s32.totalorder %s209, 1
      %s213 = scalar_select %p212, %s209, 1
      %s214 = smul.addr %s211, 2
      %s215 = sadd.s32 %s213, %s214
      %s216 = smul.addr %s215, 8
      %s217 = scalar_lea.vmem %s3, %s216
      %s218 = smul.u32 2, %s19
      %p219 = scmp.lt.s32.totalorder %s18, 1
      %s220 = scalar_select %p219, %s18, 1
      %p221 = scmp.lt.s32.totalorder %s218, 1
      %s222 = scalar_select %p221, %s218, 1
      %s223 = smul.addr %s220, 2
      %s224 = sadd.s32 %s222, %s223
      %s225 = smul.addr %s224, 8
      %s226 = scalar_lea.vmem %s0, %s225
      %s227 = smul.u32 2, %s19
      %p228 = scmp.lt.s32.totalorder %s18, 1
      %s229 = scalar_select %p228, %s18, 1
      %s230 = smul.addr %s229, 8
      %s231 = scalar_lea.vmem %s1, %s230
      %p232 = scmp.lt.s32.totalorder %s18, 1
      %s233 = scalar_select %p232, %s18, 1
      %s234 = sadd.s32 %s233, 2
      %s235 = smul.addr %s234, 8
      %s236 = scalar_lea.vmem %s2, %s235
      %s237 = smul.u32 2, %s19
      %p238 = scmp.lt.s32.totalorder %s18, 1
      %s239 = scalar_select %p238, %s18, 1
      %p240 = scmp.lt.s32.totalorder %s237, 1
      %s241 = scalar_select %p240, %s237, 1
      %s242 = smul.addr %s239, 2
      %s243 = sadd.s32 %s241, %s242
      %s244 = smul.addr %s243, 8
      %s245 = scalar_lea.vmem %s3, %s244
      %s246 = smul.u32 2, %s19
      %v247 = vld [vmem:[%s226] sm:$0xff]
      %v248 = vld [vmem:[%s226 + $0x8] sm:$0xff]
      %v249 = vld [vmem:[%s231] sm:$0xff]
      %v250 = vld [vmem:[%s236] sm:$0xff]
      %vm251 = vcmask 64512
      %v253 = vsel %vm251, %v247, 0
      %v256 = vsel %vm251, %v248, 0
      %v259 = vsel %vm251, %v249, 0
      %261 = vmatprep.subr.mxu0 0.0
      %262 = vmatpush1.xpose.msra.mxu0 %v259
      %263 = vmatprep.subr.mxu0 0.0
      %264 = vmatpush1.xpose.msra.mxu0 0.0
      %265 = vmatprep.subr.mxu0 0.0
      %266 = vmatpush1.xpose.msra.mxu0 0.0
      %267 = vmatprep.subr.mxu0 0.0
      %268 = vmatpush1.xpose.msra.mxu0 0.0
      %269 = vmatprep.subr.mxu0 0.0
      %270 = vmatpush1.xpose.msra.mxu0 0.0
      %271 = vmatprep.subr.mxu0 0.0
      %272 = vmatpush1.xpose.msra.mxu0 0.0
      %273 = vmatprep.subr.mxu0 0.0
      %274 = vmatpush1.xpose.msra.mxu0 0.0
      %275 = vmatprep.subr.mxu0 0.0
      %276 = vmatpush1.xpose.msra.mxu0 0.0
      %277 = vmatprep.subr.mxu0 0.0
      %278 = vmatpush1.xpose.msra.mxu0 0.0
      %279 = vmatprep.subr.mxu0 0.0
      %280 = vmatpush1.xpose.msra.mxu0 0.0
      %281 = vmatprep.subr.mxu0 0.0
      %282 = vmatpush1.xpose.msra.mxu0 0.0
      %283 = vmatprep.subr.mxu0 0.0
      %284 = vmatpush1.xpose.msra.mxu0 0.0
      %285 = vmatprep.subr.mxu0 0.0
      %286 = vmatpush1.xpose.msra.mxu0 0.0
      %287 = vmatprep.subr.mxu0 0.0
      %288 = vmatpush1.xpose.msra.mxu0 0.0
      %289 = vmatprep.subr.mxu0 0.0
      %290 = vmatpush1.xpose.msra.mxu0 0.0
      %291 = vmatprep.subr.mxu0 0.0
      %292 = vmatpush1.xpose.msra.mxu0 0.0
      %293 = vmatprep.subr.mxu0 0.0
      %294 = vmatpush1.xpose.msra.mxu0 0.0
      %295 = vmatprep.subr.mxu0 0.0
      %296 = vmatpush1.xpose.msra.mxu0 0.0
      %297 = vmatprep.subr.mxu0 0.0
      %298 = vmatpush1.xpose.msra.mxu0 0.0
      %299 = vmatprep.subr.mxu0 0.0
      %300 = vmatpush1.xpose.msra.mxu0 0.0
      %301 = vmatprep.subr.mxu0 0.0
      %302 = vmatpush1.xpose.msra.mxu0 0.0
      %303 = vmatprep.subr.mxu0 0.0
      %304 = vmatpush1.xpose.msra.mxu0 0.0
      %305 = vmatprep.subr.mxu0 0.0
      %306 = vmatpush1.xpose.msra.mxu0 0.0
      %307 = vmatprep.subr.mxu0 0.0
      %308 = vmatpush1.xpose.msra.mxu0 0.0
      %309 = vmatprep.subr.mxu0 0.0
      %310 = vmatpush1.xpose.msra.mxu0 0.0
      %311 = vmatprep.subr.mxu0 0.0
      %312 = vmatpush1.xpose.msra.mxu0 0.0
      %313 = vmatprep.subr.mxu0 0.0
      %314 = vmatpush1.xpose.msra.mxu0 0.0
      %315 = vmatprep.subr.mxu0 0.0
      %316 = vmatpush1.xpose.msra.mxu0 0.0
      %317 = vmatprep.subr.mxu0 0.0
      %318 = vmatpush1.xpose.msra.mxu0 0.0
      %319 = vmatprep.subr.mxu0 0.0
      %320 = vmatpush1.xpose.msra.mxu0 0.0
      %321 = vmatprep.subr.mxu0 0.0
      %322 = vmatpush1.xpose.msra.mxu0 0.0
      %323 = vmatprep.subr.mxu0 0.0
      %324 = vmatpush1.xpose.msra.mxu0 0.0
      %325 = vmatprep.mubr.f32.mxu0 0.0
      %326 = vmatmul.mubr.f32.gmra.mrb[0].mxu0 %v253
      %v327 = vpop.f32.mrb[0].mxu0
      %v328 = vadd.f32 0.0, %v327
      %v329 = vpop.f32.mrb[0].mxu0
      %330 = vmatprep.mubr.f32.mxu0 0.0
      %331 = vmatmul.mubr.f32.gmra.mrb[0].mxu0 %v256
      %v332 = vpop.f32.mrb[0].mxu0
      %v333 = vadd.f32 0.0, %v332
      %v334 = vpop.f32.mrb[0].mxu0
      %335 = vdwg.mxu0
      %v336 = vsel %vm251, %v328, -inf
      %337 = vmax.xlane.f32.xlu0 %v336
      %v338 = vpop.xlane.xlu0 %337
      %v339 = vsel %vm251, %v333, -inf
      %340 = vmax.xlane.f32.xlu0 %v339
      %v341 = vpop.xlane.xlu0 %340
      %v342 = vsub.f32 %v328, %v338
      %v343 = vsub.f32 %v333, %v341
      %v344 = vmul.f32 %v342, 1.442695
      %v345 = vpow.pop %v344
      %v346 = vmul.f32 %v343, 1.442695
      %v347 = vpow.pop %v346
      %v348 = vsel %vm251, %v345, 0.0
      %349 = vadd.xlane.f32.xlu0 %v348
      %v350 = vpop.xlane.xlu0 %349
      %v351 = vsel %vm251, %v347, 0.0
      %352 = vadd.xlane.f32.xlu0 %v351
      %v353 = vpop.xlane.xlu0 %352
      %v354 = vrcp.pop %v350
      %v355 = vrcp.pop %v353
      %v356 = vmul.f32 %v345, %v354
      %v357 = vmul.f32 %v347, %v355
      %v359 = vsel %vm251, %v356, 0
      %v362 = vsel %vm251, %v357, 0
      %364 = vmatprep.subr.mxu0 0.0
      %365 = vmatpush1.msra.mxu0 %v250
      %366 = vmatprep.subr.mxu0 0.0
      %367 = vmatpush1.msra.mxu0 0.0
      %368 = vmatprep.subr.mxu0 0.0
      %369 = vmatpush1.msra.mxu0 0.0
      %370 = vmatprep.subr.mxu0 0.0
      %371 = vmatpush1.msra.mxu0 0.0
      %372 = vmatprep.subr.mxu0 0.0
      %373 = vmatpush1.msra.mxu0 0.0
      %374 = vmatprep.subr.mxu0 0.0
      %375 = vmatpush1.msra.mxu0 0.0
      %376 = vmatprep.subr.mxu0 0.0
      %377 = vmatpush1.msra.mxu0 0.0
      %378 = vmatprep.subr.mxu0 0.0
      %379 = vmatpush1.msra.mxu0 0.0
      %380 = vmatprep.subr.mxu0 0.0
      %381 = vmatpush1.msra.mxu0 0.0
      %382 = vmatprep.subr.mxu0 0.0
      %383 = vmatpush1.msra.mxu0 0.0
      %384 = vmatprep.subr.mxu0 0.0
      %385 = vmatpush1.msra.mxu0 0.0
      %386 = vmatprep.subr.mxu0 0.0
      %387 = vmatpush1.msra.mxu0 0.0
      %388 = vmatprep.subr.mxu0 0.0
      %389 = vmatpush1.msra.mxu0 0.0
      %390 = vmatprep.subr.mxu0 0.0
      %391 = vmatpush1.msra.mxu0 0.0
      %392 = vmatprep.subr.mxu0 0.0
      %393 = vmatpush1.msra.mxu0 0.0
      %394 = vmatprep.subr.mxu0 0.0
      %395 = vmatpush1.msra.mxu0 0.0
      %396 = vmatprep.subr.mxu0 0.0
      %397 = vmatpush1.msra.mxu0 0.0
      %398 = vmatprep.subr.mxu0 0.0
      %399 = vmatpush1.msra.mxu0 0.0
      %400 = vmatprep.subr.mxu0 0.0
      %401 = vmatpush1.msra.mxu0 0.0
      %402 = vmatprep.subr.mxu0 0.0
      %403 = vmatpush1.msra.mxu0 0.0
      %404 = vmatprep.subr.mxu0 0.0
      %405 = vmatpush1.msra.mxu0 0.0
      %406 = vmatprep.subr.mxu0 0.0
      %407 = vmatpush1.msra.mxu0 0.0
      %408 = vmatprep.subr.mxu0 0.0
      %409 = vmatpush1.msra.mxu0 0.0
      %410 = vmatprep.subr.mxu0 0.0
      %411 = vmatpush1.msra.mxu0 0.0
      %412 = vmatprep.subr.mxu0 0.0
      %413 = vmatpush1.msra.mxu0 0.0
      %414 = vmatprep.subr.mxu0 0.0
      %415 = vmatpush1.msra.mxu0 0.0
      %416 = vmatprep.subr.mxu0 0.0
      %417 = vmatpush1.msra.mxu0 0.0
      %418 = vmatprep.subr.mxu0 0.0
      %419 = vmatpush1.msra.mxu0 0.0
      %420 = vmatprep.subr.mxu0 0.0
      %421 = vmatpush1.msra.mxu0 0.0
      %422 = vmatprep.subr.mxu0 0.0
      %423 = vmatpush1.msra.mxu0 0.0
      %424 = vmatprep.subr.mxu0 0.0
      %425 = vmatpush1.msra.mxu0 0.0
      %426 = vmatprep.subr.mxu0 0.0
      %427 = vmatpush1.msra.mxu0 0.0
      %428 = vmatprep.mubr.f32.mxu0 0.0
      %429 = vmatmul.mubr.f32.gmra.mrb[0].mxu0 %v359
      %v430 = vpop.f32.mrb[0].mxu0
      %v431 = vadd.f32 0.0, %v430
      %v432 = vpop.f32.mrb[0].mxu0
      %433 = vmatprep.mubr.f32.mxu0 0.0
      %434 = vmatmul.mubr.f32.gmra.mrb[0].mxu0 %v362
      %v435 = vpop.f32.mrb[0].mxu0
      %v436 = vadd.f32 0.0, %v435
      %v437 = vpop.f32.mrb[0].mxu0
      %438 = vdwg.mxu0
      %439 = vrot.lane.b32.xlu0 %v247, 120
      %v440 = vpop.permute.xlu0 %439
      %441 = vrot.lane.b32.xlu0 %v248, 120
      %v442 = vpop.permute.xlu0 %441
      %443 = vrot.lane.b32.xlu0 %v249, 120
      %v444 = vpop.permute.xlu0 %443
      %v445 = vsel %vm251, %v440, 0
      %v447 = vsel %vm251, %v442, 0
      %v449 = vsel %vm251, %v444, 0
      %451 = vmatprep.subr.mxu0 0.0
      %452 = vmatpush1.xpose.msra.mxu0 %v449
      %453 = vmatprep.subr.mxu0 0.0
      %454 = vmatpush1.xpose.msra.mxu0 0.0
      %455 = vmatprep.subr.mxu0 0.0
      %456 = vmatpush1.xpose.msra.mxu0 0.0
      %457 = vmatprep.subr.mxu0 0.0
      %458 = vmatpush1.xpose.msra.mxu0 0.0
      %459 = vmatprep.subr.mxu0 0.0
      %460 = vmatpush1.xpose.msra.mxu0 0.0
      %461 = vmatprep.subr.mxu0 0.0
      %462 = vmatpush1.xpose.msra.mxu0 0.0
      %463 = vmatprep.subr.mxu0 0.0
      %464 = vmatpush1.xpose.msra.mxu0 0.0
      %465 = vmatprep.subr.mxu0 0.0
      %466 = vmatpush1.xpose.msra.mxu0 0.0
      %467 = vmatprep.subr.mxu0 0.0
      %468 = vmatpush1.xpose.msra.mxu0 0.0
      %469 = vmatprep.subr.mxu0 0.0
      %470 = vmatpush1.xpose.msra.mxu0 0.0
      %471 = vmatprep.subr.mxu0 0.0
      %472 = vmatpush1.xpose.msra.mxu0 0.0
      %473 = vmatprep.subr.mxu0 0.0
      %474 = vmatpush1.xpose.msra.mxu0 0.0
      %475 = vmatprep.subr.mxu0 0.0
      %476 = vmatpush1.xpose.msra.mxu0 0.0
      %477 = vmatprep.subr.mxu0 0.0
      %478 = vmatpush1.xpose.msra.mxu0 0.0
      %479 = vmatprep.subr.mxu0 0.0
      %480 = vmatpush1.xpose.msra.mxu0 0.0
      %481 = vmatprep.subr.mxu0 0.0
      %482 = vmatpush1.xpose.msra.mxu0 0.0
      %483 = vmatprep.subr.mxu0 0.0
      %484 = vmatpush1.xpose.msra.mxu0 0.0
      %485 = vmatprep.subr.mxu0 0.0
      %486 = vmatpush1.xpose.msra.mxu0 0.0
      %487 = vmatprep.subr.mxu0 0.0
      %488 = vmatpush1.xpose.msra.mxu0 0.0
      %489 = vmatprep.subr.mxu0 0.0
      %490 = vmatpush1.xpose.msra.mxu0 0.0
      %491 = vmatprep.subr.mxu0 0.0
      %492 = vmatpush1.xpose.msra.mxu0 0.0
      %493 = vmatprep.subr.mxu0 0.0
      %494 = vmatpush1.xpose.msra.mxu0 0.0
      %495 = vmatprep.subr.mxu0 0.0
      %496 = vmatpush1.xpose.msra.mxu0 0.0
      %497 = vmatprep.subr.mxu0 0.0
      %498 = vmatpush1.xpose.msra.mxu0 0.0
      %499 = vmatprep.subr.mxu0 0.0
      %500 = vmatpush1.xpose.msra.mxu0 0.0
      %501 = vmatprep.subr.mxu0 0.0
      %502 = vmatpush1.xpose.msra.mxu0 0.0
      %503 = vmatprep.subr.mxu0 0.0
      %504 = vmatpush1.xpose.msra.mxu0 0.0
      %505 = vmatprep.subr.mxu0 0.0
      %506 = vmatpush1.xpose.msra.mxu0 0.0
      %507 = vmatprep.subr.mxu0 0.0
      %508 = vmatpush1.xpose.msra.mxu0 0.0
      %509 = vmatprep.subr.mxu0 0.0
      %510 = vmatpush1.xpose.msra.mxu0 0.0
      %511 = vmatprep.subr.mxu0 0.0
      %512 = vmatpush1.xpose.msra.mxu0 0.0
      %513 = vmatprep.subr.mxu0 0.0
      %514 = vmatpush1.xpose.msra.mxu0 0.0
      %515 = vmatprep.mubr.f32.mxu0 0.0
      %516 = vmatmul.mubr.f32.gmra.mrb[0].mxu0 %v445
      %v517 = vpop.f32.mrb[0].mxu0
      %v518 = vadd.f32 0.0, %v517
      %v519 = vpop.f32.mrb[0].mxu0
      %520 = vmatprep.mubr.f32.mxu0 0.0
      %521 = vmatmul.mubr.f32.gmra.mrb[0].mxu0 %v447
      %v522 = vpop.f32.mrb[0].mxu0
      %v523 = vadd.f32 0.0, %v522
      %v524 = vpop.f32.mrb[0].mxu0
      %525 = vdwg.mxu0
      %v526 = vsel %vm251, %v518, -inf
      %527 = vmax.xlane.f32.xlu0 %v526
      %v528 = vpop.xlane.xlu0 %527
      %v529 = vsel %vm251, %v523, -inf
      %530 = vmax.xlane.f32.xlu0 %v529
      %v531 = vpop.xlane.xlu0 %530
      %v532 = vsub.f32 %v518, %v528
      %v533 = vsub.f32 %v523, %v531
      %v534 = vmul.f32 %v532, 1.442695
      %v535 = vpow.pop %v534
      %v536 = vmul.f32 %v533, 1.442695
      %v537 = vpow.pop %v536
      %v538 = vsel %vm251, %v535, 0.0
      %539 = vadd.xlane.f32.xlu0 %v538
      %v540 = vpop.xlane.xlu0 %539
      %v541 = vsel %vm251, %v537, 0.0
      %542 = vadd.xlane.f32.xlu0 %v541
      %v543 = vpop.xlane.xlu0 %542
      %v544 = vrcp.pop %v540
      %v545 = vrcp.pop %v543
      %v546 = vmul.f32 %v535, %v544
      %v547 = vmul.f32 %v537, %v545
      %549 = vrot.lane.b32.xlu0 %v250, 120
      %v550 = vpop.permute.xlu0 %549
      %v553 = vsel %vm251, %v546, 0
      %v556 = vsel %vm251, %v547, 0
      %558 = vmatprep.subr.mxu0 0.0
      %559 = vmatpush1.msra.mxu0 %v550
      %560 = vmatprep.subr.mxu0 0.0
      %561 = vmatpush1.msra.mxu0 0.0
      %562 = vmatprep.subr.mxu0 0.0
      %563 = vmatpush1.msra.mxu0 0.0
      %564 = vmatprep.subr.mxu0 0.0
      %565 = vmatpush1.msra.mxu0 0.0
      %566 = vmatprep.subr.mxu0 0.0
      %567 = vmatpush1.msra.mxu0 0.0
      %568 = vmatprep.subr.mxu0 0.0
      %569 = vmatpush1.msra.mxu0 0.0
      %570 = vmatprep.subr.mxu0 0.0
      %571 = vmatpush1.msra.mxu0 0.0
      %572 = vmatprep.subr.mxu0 0.0
      %573 = vmatpush1.msra.mxu0 0.0
      %574 = vmatprep.subr.mxu0 0.0
      %575 = vmatpush1.msra.mxu0 0.0
      %576 = vmatprep.subr.mxu0 0.0
      %577 = vmatpush1.msra.mxu0 0.0
      %578 = vmatprep.subr.mxu0 0.0
      %579 = vmatpush1.msra.mxu0 0.0
      %580 = vmatprep.subr.mxu0 0.0
      %581 = vmatpush1.msra.mxu0 0.0
      %582 = vmatprep.subr.mxu0 0.0
      %583 = vmatpush1.msra.mxu0 0.0
      %584 = vmatprep.subr.mxu0 0.0
      %585 = vmatpush1.msra.mxu0 0.0
      %586 = vmatprep.subr.mxu0 0.0
      %587 = vmatpush1.msra.mxu0 0.0
      %588 = vmatprep.subr.mxu0 0.0
      %589 = vmatpush1.msra.mxu0 0.0
      %590 = vmatprep.subr.mxu0 0.0
      %591 = vmatpush1.msra.mxu0 0.0
      %592 = vmatprep.subr.mxu0 0.0
      %593 = vmatpush1.msra.mxu0 0.0
      %594 = vmatprep.subr.mxu0 0.0
      %595 = vmatpush1.msra.mxu0 0.0
      %596 = vmatprep.subr.mxu0 0.0
      %597 = vmatpush1.msra.mxu0 0.0
      %598 = vmatprep.subr.mxu0 0.0
      %599 = vmatpush1.msra.mxu0 0.0
      %600 = vmatprep.subr.mxu0 0.0
      %601 = vmatpush1.msra.mxu0 0.0
      %602 = vmatprep.subr.mxu0 0.0
      %603 = vmatpush1.msra.mxu0 0.0
      %604 = vmatprep.subr.mxu0 0.0
      %605 = vmatpush1.msra.mxu0 0.0
      %606 = vmatprep.subr.mxu0 0.0
      %607 = vmatpush1.msra.mxu0 0.0
      %608 = vmatprep.subr.mxu0 0.0
      %609 = vmatpush1.msra.mxu0 0.0
      %610 = vmatprep.subr.mxu0 0.0
      %611 = vmatpush1.msra.mxu0 0.0
      %612 = vmatprep.subr.mxu0 0.0
      %613 = vmatpush1.msra.mxu0 0.0
      %614 = vmatprep.subr.mxu0 0.0
      %615 = vmatpush1.msra.mxu0 0.0
      %616 = vmatprep.subr.mxu0 0.0
      %617 = vmatpush1.msra.mxu0 0.0
      %618 = vmatprep.subr.mxu0 0.0
      %619 = vmatpush1.msra.mxu0 0.0
      %620 = vmatprep.subr.mxu0 0.0
      %621 = vmatpush1.msra.mxu0 0.0
      %622 = vmatprep.mubr.f32.mxu0 0.0
      %623 = vmatmul.mubr.f32.gmra.mrb[0].mxu0 %v553
      %v624 = vpop.f32.mrb[0].mxu0
      %v625 = vadd.f32 0.0, %v624
      %v626 = vpop.f32.mrb[0].mxu0
      %627 = vmatprep.mubr.f32.mxu0 0.0
      %628 = vmatmul.mubr.f32.gmra.mrb[0].mxu0 %v556
      %v629 = vpop.f32.mrb[0].mxu0
      %v630 = vadd.f32 0.0, %v629
      %v631 = vpop.f32.mrb[0].mxu0
      %632 = vdwg.mxu0
      %633 = vrot.lane.b32.xlu0 %v247, 112
      %v634 = vpop.permute.xlu0 %633
      %635 = vrot.lane.b32.xlu0 %v248, 112
      %v636 = vpop.permute.xlu0 %635
      %637 = vrot.lane.b32.xlu0 %v249, 112
      %v638 = vpop.permute.xlu0 %637
      %v639 = vsel %vm251, %v634, 0
      %v641 = vsel %vm251, %v636, 0
      %v643 = vsel %vm251, %v638, 0
      %645 = vmatprep.subr.mxu0 0.0
      %646 = vmatpush1.xpose.msra.mxu0 %v643
      %647 = vmatprep.subr.mxu0 0.0
      %648 = vmatpush1.xpose.msra.mxu0 0.0
      %649 = vmatprep.subr.mxu0 0.0
      %650 = vmatpush1.xpose.msra.mxu0 0.0
      %651 = vmatprep.subr.mxu0 0.0
      %652 = vmatpush1.xpose.msra.mxu0 0.0
      %653 = vmatprep.subr.mxu0 0.0
      %654 = vmatpush1.xpose.msra.mxu0 0.0
      %655 = vmatprep.subr.mxu0 0.0
      %656 = vmatpush1.xpose.msra.mxu0 0.0
      %657 = vmatprep.subr.mxu0 0.0
      %658 = vmatpush1.xpose.msra.mxu0 0.0
      %659 = vmatprep.subr.mxu0 0.0
      %660 = vmatpush1.xpose.msra.mxu0 0.0
      %661 = vmatprep.subr.mxu0 0.0
      %662 = vmatpush1.xpose.msra.mxu0 0.0
      %663 = vmatprep.subr.mxu0 0.0
      %664 = vmatpush1.xpose.msra.mxu0 0.0
      %665 = vmatprep.subr.mxu0 0.0
      %666 = vmatpush1.xpose.msra.mxu0 0.0
      %667 = vmatprep.subr.mxu0 0.0
      %668 = vmatpush1.xpose.msra.mxu0 0.0
      %669 = vmatprep.subr.mxu0 0.0
      %670 = vmatpush1.xpose.msra.mxu0 0.0
      %671 = vmatprep.subr.mxu0 0.0
      %672 = vmatpush1.xpose.msra.mxu0 0.0
      %673 = vmatprep.subr.mxu0 0.0
      %674 = vmatpush1.xpose.msra.mxu0 0.0
      %675 = vmatprep.subr.mxu0 0.0
      %676 = vmatpush1.xpose.msra.mxu0 0.0
      %677 = vmatprep.subr.mxu0 0.0
      %678 = vmatpush1.xpose.msra.mxu0 0.0
      %679 = vmatprep.subr.mxu0 0.0
      %680 = vmatpush1.xpose.msra.mxu0 0.0
      %681 = vmatprep.subr.mxu0 0.0
      %682 = vmatpush1.xpose.msra.mxu0 0.0
      %683 = vmatprep.subr.mxu0 0.0
      %684 = vmatpush1.xpose.msra.mxu0 0.0
      %685 = vmatprep.subr.mxu0 0.0
      %686 = vmatpush1.xpose.msra.mxu0 0.0
      %687 = vmatprep.subr.mxu0 0.0
      %688 = vmatpush1.xpose.msra.mxu0 0.0
      %689 = vmatprep.subr.mxu0 0.0
      %690 = vmatpush1.xpose.msra.mxu0 0.0
      %691 = vmatprep.subr.mxu0 0.0
      %692 = vmatpush1.xpose.msra.mxu0 0.0
      %693 = vmatprep.subr.mxu0 0.0
      %694 = vmatpush1.xpose.msra.mxu0 0.0
      %695 = vmatprep.subr.mxu0 0.0
      %696 = vmatpush1.xpose.msra.mxu0 0.0
      %697 = vmatprep.subr.mxu0 0.0
      %698 = vmatpush1.xpose.msra.mxu0 0.0
      %699 = vmatprep.subr.mxu0 0.0
      %700 = vmatpush1.xpose.msra.mxu0 0.0
      %701 = vmatprep.subr.mxu0 0.0
      %702 = vmatpush1.xpose.msra.mxu0 0.0
      %703 = vmatprep.subr.mxu0 0.0
      %704 = vmatpush1.xpose.msra.mxu0 0.0
      %705 = vmatprep.subr.mxu0 0.0
      %706 = vmatpush1.xpose.msra.mxu0 0.0
      %707 = vmatprep.subr.mxu0 0.0
      %708 = vmatpush1.xpose.msra.mxu0 0.0
      %709 = vmatprep.mubr.f32.mxu0 0.0
      %710 = vmatmul.mubr.f32.gmra.mrb[0].mxu0 %v639
      %v711 = vpop.f32.mrb[0].mxu0
      %v712 = vadd.f32 0.0, %v711
      %v713 = vpop.f32.mrb[0].mxu0
      %714 = vmatprep.mubr.f32.mxu0 0.0
      %715 = vmatmul.mubr.f32.gmra.mrb[0].mxu0 %v641
      %v716 = vpop.f32.mrb[0].mxu0
      %v717 = vadd.f32 0.0, %v716
      %v718 = vpop.f32.mrb[0].mxu0
      %719 = vdwg.mxu0
      %v720 = vsel %vm251, %v712, -inf
      %721 = vmax.xlane.f32.xlu0 %v720
      %v722 = vpop.xlane.xlu0 %721
      %v723 = vsel %vm251, %v717, -inf
      %724 = vmax.xlane.f32.xlu0 %v723
      %v725 = vpop.xlane.xlu0 %724
      %v726 = vsub.f32 %v712, %v722
      %v727 = vsub.f32 %v717, %v725
      %v728 = vmul.f32 %v726, 1.442695
      %v729 = vpow.pop %v728
      %v730 = vmul.f32 %v727, 1.442695
      %v731 = vpow.pop %v730
      %v732 = vsel %vm251, %v729, 0.0
      %733 = vadd.xlane.f32.xlu0 %v732
      %v734 = vpop.xlane.xlu0 %733
      %v735 = vsel %vm251, %v731, 0.0
      %736 = vadd.xlane.f32.xlu0 %v735
      %v737 = vpop.xlane.xlu0 %736
      %v738 = vrcp.pop %v734
      %v739 = vrcp.pop %v737
      %v740 = vmul.f32 %v729, %v738
      %v741 = vmul.f32 %v731, %v739
      %742 = vrot.lane.b32.xlu0 %v250, 112
      %v743 = vpop.permute.xlu0 %742
      %v746 = vsel %vm251, %v740, 0
      %v749 = vsel %vm251, %v741, 0
      %751 = vmatprep.subr.mxu0 0.0
      %752 = vmatpush1.msra.mxu0 %v743
      %753 = vmatprep.subr.mxu0 0.0
      %754 = vmatpush1.msra.mxu0 0.0
      %755 = vmatprep.subr.mxu0 0.0
      %756 = vmatpush1.msra.mxu0 0.0
      %757 = vmatprep.subr.mxu0 0.0
      %758 = vmatpush1.msra.mxu0 0.0
      %759 = vmatprep.subr.mxu0 0.0
      %760 = vmatpush1.msra.mxu0 0.0
      %761 = vmatprep.subr.mxu0 0.0
      %762 = vmatpush1.msra.mxu0 0.0
      %763 = vmatprep.subr.mxu0 0.0
      %764 = vmatpush1.msra.mxu0 0.0
      %765 = vmatprep.subr.mxu0 0.0
      %766 = vmatpush1.msra.mxu0 0.0
      %767 = vmatprep.subr.mxu0 0.0
      %768 = vmatpush1.msra.mxu0 0.0
      %769 = vmatprep.subr.mxu0 0.0
      %770 = vmatpush1.msra.mxu0 0.0
      %771 = vmatprep.subr.mxu0 0.0
      %772 = vmatpush1.msra.mxu0 0.0
      %773 = vmatprep.subr.mxu0 0.0
      %774 = vmatpush1.msra.mxu0 0.0
      %775 = vmatprep.subr.mxu0 0.0
      %776 = vmatpush1.msra.mxu0 0.0
      %777 = vmatprep.subr.mxu0 0.0
      %778 = vmatpush1.msra.mxu0 0.0
      %779 = vmatprep.subr.mxu0 0.0
      %780 = vmatpush1.msra.mxu0 0.0
      %781 = vmatprep.subr.mxu0 0.0
      %782 = vmatpush1.msra.mxu0 0.0
      %783 = vmatprep.subr.mxu0 0.0
      %784 = vmatpush1.msra.mxu0 0.0
      %785 = vmatprep.subr.mxu0 0.0
      %786 = vmatpush1.msra.mxu0 0.0
      %787 = vmatprep.subr.mxu0 0.0
      %788 = vmatpush1.msra.mxu0 0.0
      %789 = vmatprep.subr.mxu0 0.0
      %790 = vmatpush1.msra.mxu0 0.0
      %791 = vmatprep.subr.mxu0 0.0
      %792 = vmatpush1.msra.mxu0 0.0
      %793 = vmatprep.subr.mxu0 0.0
      %794 = vmatpush1.msra.mxu0 0.0
      %795 = vmatprep.subr.mxu0 0.0
      %796 = vmatpush1.msra.mxu0 0.0
      %797 = vmatprep.subr.mxu0 0.0
      %798 = vmatpush1.msra.mxu0 0.0
      %799 = vmatprep.subr.mxu0 0.0
      %800 = vmatpush1.msra.mxu0 0.0
      %801 = vmatprep.subr.mxu0 0.0
      %802 = vmatpush1.msra.mxu0 0.0
      %803 = vmatprep.subr.mxu0 0.0
      %804 = vmatpush1.msra.mxu0 0.0
      %805 = vmatprep.subr.mxu0 0.0
      %806 = vmatpush1.msra.mxu0 0.0
      %807 = vmatprep.subr.mxu0 0.0
      %808 = vmatpush1.msra.mxu0 0.0
      %809 = vmatprep.subr.mxu0 0.0
      %810 = vmatpush1.msra.mxu0 0.0
      %811 = vmatprep.subr.mxu0 0.0
      %812 = vmatpush1.msra.mxu0 0.0
      %813 = vmatprep.subr.mxu0 0.0
      %814 = vmatpush1.msra.mxu0 0.0
      %815 = vmatprep.mubr.f32.mxu0 0.0
      %816 = vmatmul.mubr.f32.gmra.mrb[0].mxu0 %v746
      %v817 = vpop.f32.mrb[0].mxu0
      %v818 = vadd.f32 0.0, %v817
      %v819 = vpop.f32.mrb[0].mxu0
      %820 = vmatprep.mubr.f32.mxu0 0.0
      %821 = vmatmul.mubr.f32.gmra.mrb[0].mxu0 %v749
      %v822 = vpop.f32.mrb[0].mxu0
      %v823 = vadd.f32 0.0, %v822
      %v824 = vpop.f32.mrb[0].mxu0
      %825 = vdwg.mxu0
      %826 = vrot.lane.b32.xlu0 %v247, 104
      %v827 = vpop.permute.xlu0 %826
      %828 = vrot.lane.b32.xlu0 %v248, 104
      %v829 = vpop.permute.xlu0 %828
      %830 = vrot.lane.b32.xlu0 %v249, 104
      %v831 = vpop.permute.xlu0 %830
      %v832 = vsel %vm251, %v827, 0
      %v834 = vsel %vm251, %v829, 0
      %v836 = vsel %vm251, %v831, 0
      %838 = vmatprep.subr.mxu0 0.0
      %839 = vmatpush1.xpose.msra.mxu0 %v836
      %840 = vmatprep.subr.mxu0 0.0
      %841 = vmatpush1.xpose.msra.mxu0 0.0
      %842 = vmatprep.subr.mxu0 0.0
      %843 = vmatpush1.xpose.msra.mxu0 0.0
      %844 = vmatprep.subr.mxu0 0.0
      %845 = vmatpush1.xpose.msra.mxu0 0.0
      %846 = vmatprep.subr.mxu0 0.0
      %847 = vmatpush1.xpose.msra.mxu0 0.0
      %848 = vmatprep.subr.mxu0 0.0
      %849 = vmatpush1.xpose.msra.mxu0 0.0
      %850 = vmatprep.subr.mxu0 0.0
      %851 = vmatpush1.xpose.msra.mxu0 0.0
      %852 = vmatprep.subr.mxu0 0.0
      %853 = vmatpush1.xpose.msra.mxu0 0.0
      %854 = vmatprep.subr.mxu0 0.0
      %855 = vmatpush1.xpose.msra.mxu0 0.0
      %856 = vmatprep.subr.mxu0 0.0
      %857 = vmatpush1.xpose.msra.mxu0 0.0
      %858 = vmatprep.subr.mxu0 0.0
      %859 = vmatpush1.xpose.msra.mxu0 0.0
      %860 = vmatprep.subr.mxu0 0.0
      %861 = vmatpush1.xpose.msra.mxu0 0.0
      %862 = vmatprep.subr.mxu0 0.0
      %863 = vmatpush1.xpose.msra.mxu0 0.0
      %864 = vmatprep.subr.mxu0 0.0
      %865 = vmatpush1.xpose.msra.mxu0 0.0
      %866 = vmatprep.subr.mxu0 0.0
      %867 = vmatpush1.xpose.msra.mxu0 0.0
      %868 = vmatprep.subr.mxu0 0.0
      %869 = vmatpush1.xpose.msra.mxu0 0.0
      %870 = vmatprep.subr.mxu0 0.0
      %871 = vmatpush1.xpose.msra.mxu0 0.0
      %872 = vmatprep.subr.mxu0 0.0
      %873 = vmatpush1.xpose.msra.mxu0 0.0
      %874 = vmatprep.subr.mxu0 0.0
      %875 = vmatpush1.xpose.msra.mxu0 0.0
      %876 = vmatprep.subr.mxu0 0.0
      %877 = vmatpush1.xpose.msra.mxu0 0.0
      %878 = vmatprep.subr.mxu0 0.0
      %879 = vmatpush1.xpose.msra.mxu0 0.0
      %880 = vmatprep.subr.mxu0 0.0
      %881 = vmatpush1.xpose.msra.mxu0 0.0
      %882 = vmatprep.subr.mxu0 0.0
      %883 = vmatpush1.xpose.msra.mxu0 0.0
      %884 = vmatprep.subr.mxu0 0.0
      %885 = vmatpush1.xpose.msra.mxu0 0.0
      %886 = vmatprep.subr.mxu0 0.0
      %887 = vmatpush1.xpose.msra.mxu0 0.0
      %888 = vmatprep.subr.mxu0 0.0
      %889 = vmatpush1.xpose.msra.mxu0 0.0
      %890 = vmatprep.subr.mxu0 0.0
      %891 = vmatpush1.xpose.msra.mxu0 0.0
      %892 = vmatprep.subr.mxu0 0.0
      %893 = vmatpush1.xpose.msra.mxu0 0.0
      %894 = vmatprep.subr.mxu0 0.0
      %895 = vmatpush1.xpose.msra.mxu0 0.0
      %896 = vmatprep.subr.mxu0 0.0
      %897 = vmatpush1.xpose.msra.mxu0 0.0
      %898 = vmatprep.subr.mxu0 0.0
      %899 = vmatpush1.xpose.msra.mxu0 0.0
      %900 = vmatprep.subr.mxu0 0.0
      %901 = vmatpush1.xpose.msra.mxu0 0.0
      %902 = vmatprep.mubr.f32.mxu0 0.0
      %903 = vmatmul.mubr.f32.gmra.mrb[0].mxu0 %v832
      %v904 = vpop.f32.mrb[0].mxu0
      %v905 = vadd.f32 0.0, %v904
      %v906 = vpop.f32.mrb[0].mxu0
      %907 = vmatprep.mubr.f32.mxu0 0.0
      %908 = vmatmul.mubr.f32.gmra.mrb[0].mxu0 %v834
      %v909 = vpop.f32.mrb[0].mxu0
      %v910 = vadd.f32 0.0, %v909
      %v911 = vpop.f32.mrb[0].mxu0
      %912 = vdwg.mxu0
      %v913 = vsel %vm251, %v905, -inf
      %914 = vmax.xlane.f32.xlu0 %v913
      %v915 = vpop.xlane.xlu0 %914
      %v916 = vsel %vm251, %v910, -inf
      %917 = vmax.xlane.f32.xlu0 %v916
      %v918 = vpop.xlane.xlu0 %917
      %v919 = vsub.f32 %v905, %v915
      %v920 = vsub.f32 %v910, %v918
      %v921 = vmul.f32 %v919, 1.442695
      %v922 = vpow.pop %v921
      %v923 = vmul.f32 %v920, 1.442695
      %v924 = vpow.pop %v923
      %v925 = vsel %vm251, %v922, 0.0
      %926 = vadd.xlane.f32.xlu0 %v925
      %v927 = vpop.xlane.xlu0 %926
      %v928 = vsel %vm251, %v924, 0.0
      %929 = vadd.xlane.f32.xlu0 %v928
      %v930 = vpop.xlane.xlu0 %929
      %v931 = vrcp.pop %v927
      %v932 = vrcp.pop %v930
      %v933 = vmul.f32 %v922, %v931
      %v934 = vmul.f32 %v924, %v932
      %935 = vrot.lane.b32.xlu0 %v250, 104
      %v936 = vpop.permute.xlu0 %935
      %v939 = vsel %vm251, %v933, 0
      %v942 = vsel %vm251, %v934, 0
      %944 = vmatprep.subr.mxu0 0.0
      %945 = vmatpush1.msra.mxu0 %v936
      %946 = vmatprep.subr.mxu0 0.0
      %947 = vmatpush1.msra.mxu0 0.0
      %948 = vmatprep.subr.mxu0 0.0
      %949 = vmatpush1.msra.mxu0 0.0
      %950 = vmatprep.subr.mxu0 0.0
      %951 = vmatpush1.msra.mxu0 0.0
      %952 = vmatprep.subr.mxu0 0.0
      %953 = vmatpush1.msra.mxu0 0.0
      %954 = vmatprep.subr.mxu0 0.0
      %955 = vmatpush1.msra.mxu0 0.0
      %956 = vmatprep.subr.mxu0 0.0
      %957 = vmatpush1.msra.mxu0 0.0
      %958 = vmatprep.subr.mxu0 0.0
      %959 = vmatpush1.msra.mxu0 0.0
      %960 = vmatprep.subr.mxu0 0.0
      %961 = vmatpush1.msra.mxu0 0.0
      %962 = vmatprep.subr.mxu0 0.0
      %963 = vmatpush1.msra.mxu0 0.0
      %964 = vmatprep.subr.mxu0 0.0
      %965 = vmatpush1.msra.mxu0 0.0
      %966 = vmatprep.subr.mxu0 0.0
      %967 = vmatpush1.msra.mxu0 0.0
      %968 = vmatprep.subr.mxu0 0.0
      %969 = vmatpush1.msra.mxu0 0.0
      %970 = vmatprep.subr.mxu0 0.0
      %971 = vmatpush1.msra.mxu0 0.0
      %972 = vmatprep.subr.mxu0 0.0
      %973 = vmatpush1.msra.mxu0 0.0
      %974 = vmatprep.subr.mxu0 0.0
      %975 = vmatpush1.msra.mxu0 0.0
      %976 = vmatprep.subr.mxu0 0.0
      %977 = vmatpush1.msra.mxu0 0.0
      %978 = vmatprep.subr.mxu0 0.0
      %979 = vmatpush1.msra.mxu0 0.0
      %980 = vmatprep.subr.mxu0 0.0
      %981 = vmatpush1.msra.mxu0 0.0
      %982 = vmatprep.subr.mxu0 0.0
      %983 = vmatpush1.msra.mxu0 0.0
      %984 = vmatprep.subr.mxu0 0.0
      %985 = vmatpush1.msra.mxu0 0.0
      %986 = vmatprep.subr.mxu0 0.0
      %987 = vmatpush1.msra.mxu0 0.0
      %988 = vmatprep.subr.mxu0 0.0
      %989 = vmatpush1.msra.mxu0 0.0
      %990 = vmatprep.subr.mxu0 0.0
      %991 = vmatpush1.msra.mxu0 0.0
      %992 = vmatprep.subr.mxu0 0.0
      %993 = vmatpush1.msra.mxu0 0.0
      %994 = vmatprep.subr.mxu0 0.0
      %995 = vmatpush1.msra.mxu0 0.0
      %996 = vmatprep.subr.mxu0 0.0
      %997 = vmatpush1.msra.mxu0 0.0
      %998 = vmatprep.subr.mxu0 0.0
      %999 = vmatpush1.msra.mxu0 0.0
      %1000 = vmatprep.subr.mxu0 0.0
      %1001 = vmatpush1.msra.mxu0 0.0
      %1002 = vmatprep.subr.mxu0 0.0
      %1003 = vmatpush1.msra.mxu0 0.0
      %1004 = vmatprep.subr.mxu0 0.0
      %1005 = vmatpush1.msra.mxu0 0.0
      %1006 = vmatprep.subr.mxu0 0.0
      %1007 = vmatpush1.msra.mxu0 0.0
      %1008 = vmatprep.mubr.f32.mxu0 0.0
      %1009 = vmatmul.mubr.f32.gmra.mrb[0].mxu0 %v939
      %v1010 = vpop.f32.mrb[0].mxu0
      %v1011 = vadd.f32 0.0, %v1010
      %v1012 = vpop.f32.mrb[0].mxu0
      %1013 = vmatprep.mubr.f32.mxu0 0.0
      %1014 = vmatmul.mubr.f32.gmra.mrb[0].mxu0 %v942
      %v1015 = vpop.f32.mrb[0].mxu0
      %v1016 = vadd.f32 0.0, %v1015
      %v1017 = vpop.f32.mrb[0].mxu0
      %1018 = vdwg.mxu0
      %1021 = vrot.lane.b32.xlu0 %v625, 8
      %v1022 = vpop.permute.xlu0 %1021
      %1023 = vrot.lane.b32.xlu0 %v630, 8
      %v1024 = vpop.permute.xlu0 %1023
      %1029 = vrot.lane.b32.xlu0 %v818, 16
      %v1030 = vpop.permute.xlu0 %1029
      %1031 = vrot.lane.b32.xlu0 %v823, 16
      %v1032 = vpop.permute.xlu0 %1031
      %1037 = vrot.lane.b32.xlu0 %v1011, 24
      %v1038 = vpop.permute.xlu0 %1037
      %1039 = vrot.lane.b32.xlu0 %v1016, 24
      %v1040 = vpop.permute.xlu0 %1039
      %v1043 = vsel %vm251, %v431, %v1022
      %v1044 = vsel %vm251, %v436, %v1024
      %vm1045 = vcmask 130048
      %v1046 = vsel %vm1045, %v1043, %v1030
      %v1047 = vsel %vm1045, %v1044, %v1032
      %vm1048 = vcmask 195584
      %v1049 = vsel %vm1048, %v1046, %v1038
      %v1050 = vsel %vm1048, %v1047, %v1040
      %vm1051 = vcmask 261120
      %1052 = vst.msk [vmem:[%s245] sm:$0xff] %vm1051, %v1049
      %1053 = vst.msk [vmem:[%s245 + $0x8] sm:$0xff] %vm1051, %v1050
      %s1054 = smul.u32 2, %s19
      %p1055 = scmp.lt.s32.totalorder %s18, 1
      %s1056 = scalar_select %p1055, %s18, 1
      %p1057 = scmp.lt.s32.totalorder %s1054, 1
      %s1058 = scalar_select %p1057, %s1054, 1
      %s1059 = smul.addr %s1056, 2
      %s1060 = sadd.s32 %s1058, %s1059
      %s1061 = smul.addr %s1060, 8
      %s1062 = scalar_lea.vmem %s3, %s1061
      // Predicated region
      $region33: #{linformer_attention.6} parent=31 // pred_check
        %p1063 = pneg %p126
      $region34: #{linformer_attention.6} parent=31 // pred_check_branch
        %1065 = sbr.rel (%p1063) target = $region36
      $region35: #{linformer_attention.6} parent=31 // pred_region
        %s1066 = smul.u32 2, %s19
      $region36: #{linformer_attention.6} parent=31 // pred_fallthru
        _
    $region32: #{linformer_attention.6} parent=5 // pred_fallthru
      _
    %p1067 = scmp.le.s32.totalorder 2, %s9
    // Predicated region
    $region37: #{linformer_attention.6} parent=5 // pred_check
      %p1068 = pneg %p1067
    $region38: #{linformer_attention.6} parent=5 // pred_check_branch
      %1070 = sbr.rel (%p1068) target = $region40
    $region39: #{linformer_attention.6} parent=5 // pred_region
      %s1071 = ssub.s32 %s9, 2
      // Predicated region
      $region41: #{linformer_attention.6} parent=39 // pred_check
        %p1072 = pneg %p132
      $region42: #{linformer_attention.6} parent=39 // pred_check_branch
        %1074 = sbr.rel (%p1072) target = $region44
      $region43: #{linformer_attention.6} parent=39 // pred_region
        %s1075 = smul.u32 2, %s21
        %p1076 = scmp.lt.s32.totalorder %s20, 1
        %s1077 = scalar_select %p1076, %s20, 1
        %p1078 = scmp.lt.s32.totalorder %s1075, 1
        %s1079 = scalar_select %p1078, %s1075, 1
        %s1080 = smul.addr %s1077, 2
        %s1081 = sadd.s32 %s1079, %s1080
        %s1082 = smul.addr %s1081, 8
        %s1083 = scalar_lea.vmem %s3, %s1082
      $region44: #{linformer_attention.6} parent=39 // pred_fallthru
        _
    $region40: #{linformer_attention.6} parent=5 // pred_fallthru
      _
  $region6: #{linformer_attention.6} parent=0 // loop_footer
    %s13 = sadd.s32 1, %s9
  $region7: #{linformer_attention.6} parent=0 // loop_footer_branch
    %8 = sbr.rel target = $region3
  $region8: #{linformer_attention.6} parent=0 // loop_exit
    _

</llo_original>
